<compile_context>
chip_gen: v7x
topology: tpu7x:2x2x1
jax: 0.10.0
libtpu: 0.0.40
codegen_flags: <defaults>
</compile_context>

<pallas_src>
import jax
import jax.numpy as jnp
from jax.experimental import pallas as pl
from jax.experimental.pallas import tpu as pltpu

EPS = 1e-6                 # module-level EPS in the spec
MASK_THRESHOLD_DB = 20.0   # speechMask(..., threshold=20) inside ipd_loss_rads
_POW_RATIO = 10.0 ** (-MASK_THRESHOLD_DB / 10.0)   # dB compare done in the power domain

F_TILE = 128               # lane-aligned frequency tile (F zero-padded to a multiple)

_PI = 3.141592653589793
_PI_2 = _PI / 2.0
_PI_4 = _PI / 4.0
_TAN_PI_8 = 0.4142135623730951


def _approx_div(num, den):
    """num / den (den > 0): EUP approx reciprocal + one Newton step (cheap on VALU)."""
    r = pl.reciprocal(den, approx=True)
    r = r * (2.0 - den * r)          # Newton refinement: squares the relative error
    return num * r


def _atan01(a):
    """arctan(a) for a in [0, 1] — cephes reduction at tan(pi/8) + degree-7 poly."""
    med = a > _TAN_PI_8
    xr = jnp.where(med, _approx_div(a - 1.0, a + 1.0), a)    # |xr| <= tan(pi/8)
    y0 = jnp.where(med, _PI_4, 0.0)
    z = xr * xr
    p = ((8.05374449538e-2 * z - 1.38776856032e-1) * z + 1.99777106478e-1) * z \
        - 3.33329491539e-1
    return y0 + p * z * xr + xr


def _atan2(y, x):
    """Elementwise atan2(y, x) with torch conventions; one approx divide + selects."""
    ax = jnp.abs(x)
    ay = jnp.abs(y)
    mx = jnp.maximum(jnp.maximum(ax, ay), 1e-30)   # floor avoids inf/nan in the reciprocal
    mn = jnp.minimum(ax, ay)
    r = _atan01(_approx_div(mn, mx))               # atan(min/max) in [0, pi/4]
    r = jnp.where(ay > ax, _PI_2 - r, r)           # first-quadrant angle atan(|y|/|x|)
    r = jnp.where(x < 0.0, _PI - r, r)             # left half-plane
    return jnp.where(y < 0.0, -r, r)               # lower half-plane


def _ipd_loss_kernel(stack_ref, num_ref, den_ref):
    """One (batch, F-tile) pair per grid step: partial masked-IPD num/den sums.

    stack_ref block: (1, 8, T, F_TILE) holding
      [tl_re, tl_im, tr_re, tr_im, ol_re, ol_im, or_re, or_im],
    time on sublanes, frequency on lanes (lane-dense, 128-aligned)."""
    tl_re = stack_ref[0, 0, :, :]
    tl_im = stack_ref[0, 1, :, :]
    tr_re = stack_ref[0, 2, :, :]
    tr_im = stack_ref[0, 3, :, :]
    ol_re = stack_ref[0, 4, :, :]
    ol_im = stack_ref[0, 5, :, :]
    or_re = stack_ref[0, 6, :, :]
    or_im = stack_ref[0, 7, :, :]

    # speechMask on the *target* STFTs, in the power domain (transcendental/NaN free):
    #   20*log10|s| > 10*log10(max_t |s|^2) - 20dB   <=>   |s|^2 > max_t|s|^2 * 1e-2.
    # The max is over TIME (sublane axis), so F tiles are independent. Zero-padded
    # frequency bins give p = thr = 0 -> mask = 0 and contribute nothing.
    p_l = tl_re * tl_re + tl_im * tl_im
    p_r = tr_re * tr_re + tr_im * tr_im
    thr_l = jnp.max(p_l, axis=0, keepdims=True) * _POW_RATIO
    thr_r = jnp.max(p_r, axis=0, keepdims=True) * _POW_RATIO
    mask = jnp.where(jnp.logical_and(p_l > thr_l, p_r > thr_r), 1.0, 0.0)

    # IPD = angle((s_l + eps) / (s_r + eps)) = atan2(Im(z), Re(z)) with
    # z = (s_l + eps) * conj(s_r + eps)  (same angle, no complex divide needed).
    def ipd(lre, lim, rre, rim):
        lr = lre + EPS
        rr = rre + EPS
        re = lr * rr + lim * rim
        im = lim * rr - lr * rim
        return _atan2(im, re)

    err = jnp.abs(ipd(tl_re, tl_im, tr_re, tr_im)
                  - ipd(ol_re, ol_im, or_re, or_im))

    num = jnp.sum(err * mask)
    den = jnp.sum(mask)
    # (1, 1, 8, 128) lane/sublane-aligned output blocks; wrapper reads [:, :, 0, 0].
    num_ref[...] = jnp.zeros(num_ref.shape, jnp.float32) + num
    den_ref[...] = jnp.zeros(den_ref.shape, jnp.float32) + den


def _masked_ipd_sums(t_l, t_r, o_l, o_r):
    """Fused Pallas call: per-batch (numerator, denominator) of the masked IPD loss.

    Inputs are complex STFTs laid out [B, T, F] (frequency last -> TPU lane dim)."""
    B, T, F = t_l.shape
    f_pad = pl.cdiv(F, F_TILE) * F_TILE
    nf = f_pad // F_TILE

    # One stacked f32 array [B, 8, T, F_pad]: one DMA descriptor per grid step.
    planes = jnp.stack(
        [jnp.real(t_l), jnp.imag(t_l), jnp.real(t_r), jnp.imag(t_r),
         jnp.real(o_l), jnp.imag(o_l), jnp.real(o_r), jnp.imag(o_r)],
        axis=1).astype(jnp.float32)
    planes = jnp.pad(planes, ((0, 0), (0, 0), (0, 0), (0, f_pad - F)))

    in_spec = pl.BlockSpec((1, 8, T, F_TILE), lambda b, f: (b, 0, 0, f))
    out_spec = pl.BlockSpec((1, 1, 8, 128), lambda b, f: (b, f, 0, 0))

    elems = B * T * f_pad
    cost = pl.CostEstimate(
        flops=110 * elems,                     # power/mask compares, complex mults, atan2 poly
        transcendentals=4 * elems,             # approx EUP reciprocals
        bytes_accessed=8 * 4 * elems + 2 * B * nf * 8 * 128 * 4,
    )

    # Explicit VMEM budget: double-buffered stacked input block + outputs + headroom.
    block_bytes = 8 * T * F_TILE * 4
    vmem_limit = int(min(max(2 * block_bytes + (4 << 20), 32 << 20), 56 << 20))

    num, den = pl.pallas_call(
        _ipd_loss_kernel,
        out_shape=(
            jax.ShapeDtypeStruct((B, nf, 8, 128), jnp.float32),
            jax.ShapeDtypeStruct((B, nf, 8, 128), jnp.float32),
        ),
        grid_spec=pltpu.PrefetchScalarGridSpec(
            num_scalar_prefetch=0,
            grid=(B, nf),
            in_specs=[in_spec],
            out_specs=[out_spec, out_spec],
        ),
        compiler_params=pltpu.CompilerParams(
            # Both axes independent -> v7x megacore shards over B and F tiles; on
            # single-TC v5e/v6e the grid is a serial (pipelined) loop either way.
            dimension_semantics=("parallel", "parallel"),
            vmem_limit_bytes=vmem_limit,
        ),
        cost_estimate=cost,
    )(planes)
    # Reduce the per-F-tile partials (tiny: nf == 3 for fft_len=512).
    return jnp.sum(num[:, :, 0, 0], axis=1), jnp.sum(den[:, :, 0, 0], axis=1)


def _stft(x, fft_len, hop, win_len):
    """One-sided STFT matching torch.stft defaults (center=True reflect pad,
    rectangular window of win_len zero-padded to fft_len, not normalized).
    x: [B, N] float32 -> complex64 [B, T, F], F = fft_len//2 + 1 (frequency LAST)."""
    pad = fft_len // 2
    xp = jnp.pad(x, ((0, 0), (pad, pad)), mode="reflect")
    n_frames = 1 + (xp.shape[-1] - fft_len) // hop
    starts = jnp.arange(n_frames) * hop
    idx = starts[:, None] + jnp.arange(fft_len)[None, :]      # [T, fft_len]
    frames = xp[:, idx]                                        # [B, T, fft_len]
    left = (fft_len - win_len) // 2
    win = jnp.zeros((fft_len,), jnp.float32).at[left:left + win_len].set(1.0)
    return jnp.fft.rfft(frames * win, axis=-1)                 # [B, T, F]


def binaural_loss(model_output, targets, *, fft_len=512, win_inc=100,
                  win_len=400, ipd_weight=1.0):
    """Pallas-backed BinauralLoss.forward (IPD term). Inputs: [B, 2, N] waveforms."""
    if ipd_weight <= 0:
        return jnp.float32(0.0)
    model_output = model_output.astype(jnp.float32)
    targets = targets.astype(jnp.float32)
    t_l = _stft(targets[:, 0], fft_len, win_inc, win_len)
    t_r = _stft(targets[:, 1], fft_len, win_inc, win_len)
    o_l = _stft(model_output[:, 0], fft_len, win_inc, win_len)
    o_r = _stft(model_output[:, 1], fft_len, win_inc, win_len)
    num, den = _masked_ipd_sums(t_l, t_r, o_l, o_r)
    # NOTE: an empty speech mask (den == 0) yields NaN, exactly like the PyTorch reference.
    return (ipd_weight * jnp.mean(num / den)).astype(jnp.float32)


def _reference_loss(model_output, targets, *, fft_len=512, win_inc=100,
                    win_len=400, ipd_weight=1.0):
    """Plain-JAX mirror of the PyTorch math (log-domain mask, jnp.angle) for validation.
    Layout is [B, T, F]; the masked mean is layout-invariant vs torch's [B, F, T]."""
    model_output = model_output.astype(jnp.float32)
    targets = targets.astype(jnp.float32)
    t_l = _stft(targets[:, 0], fft_len, win_inc, win_len)
    t_r = _stft(targets[:, 1], fft_len, win_inc, win_len)
    o_l = _stft(model_output[:, 0], fft_len, win_inc, win_len)
    o_r = _stft(model_output[:, 1], fft_len, win_inc, win_len)

    def ipd(s1, s2):
        return jnp.angle((s1 + EPS) / (s2 + EPS))

    err = jnp.abs(ipd(t_l, t_r) - ipd(o_l, o_r))

    def half_mask(s):
        p = jnp.abs(s) ** 2
        thr = 10.0 * jnp.log10(jnp.max(p, axis=1, keepdims=True)) - MASK_THRESHOLD_DB
        return 20.0 * jnp.log10(jnp.abs(s)) > thr

    mask = jnp.logical_and(half_mask(t_l), half_mask(t_r)).astype(jnp.float32)
    per_b = jnp.sum(err * mask, axis=(1, 2)) / jnp.sum(mask, axis=(1, 2))
    return ipd_weight * jnp.mean(per_b)


if __name__ == "__main__":
    key = jax.random.PRNGKey(0)
    k1, k2 = jax.random.split(key)
    B, N = 2, 4000                      # [batch, stereo (L/R), samples]
    targets = jax.random.normal(k1, (B, 2, N), dtype=jnp.float32)
    model_output = targets + 0.3 * jax.random.normal(k2, (B, 2, N), dtype=jnp.float32)

    loss = jax.block_until_ready(jax.jit(binaural_loss)(model_output, targets))
    ref = jax.block_until_ready(_reference_loss(model_output, targets))

    assert jnp.isfinite(loss), float(loss)
    assert abs(float(loss) - float(ref)) <= 1e-3 * max(1.0, abs(float(ref))), \
        (float(loss), float(ref))
    print("KERNEL_OK")
</pallas_src>

<mosaic_0001>
module attributes {stable_mosaic.version = 11 : i64} {
  func.func @_ipd_loss_kernel(%arg0: i32, %arg1: i32, %arg2: memref<1x8x41x128xf32, #tpu.memory_space<vmem>>, %arg3: memref<1x1x8x128xf32, #tpu.memory_space<vmem>>, %arg4: memref<1x1x8x128xf32, #tpu.memory_space<vmem>>) attributes {dimension_semantics = [#tpu.dimension_semantics<parallel>, #tpu.dimension_semantics<parallel>], iteration_bounds = array<i64: 2, 3>, scalar_prefetch = 0 : i64, scratch_operands = 0 : i64, tpu.core_type = #tpu.core_type<tc>, window_params = [{transform_indices = @transform_0, window_bounds = array<i64: 1, 8, 41, 128>}, {transform_indices = @transform_1, window_bounds = array<i64: 1, 1, 8, 128>}, {transform_indices = @transform_2, window_bounds = array<i64: 1, 1, 8, 128>}]} {
    %c0 = arith.constant 0 : index
    %c0_0 = arith.constant 0 : index
    %c0_1 = arith.constant 0 : index
    %c0_2 = arith.constant 0 : index
    %0 = vector.load %arg2[%c0, %c0_0, %c0_1, %c0_2] : memref<1x8x41x128xf32, #tpu.memory_space<vmem>>, vector<1x1x41x128xf32>
    %1 = vector.shape_cast %0 : vector<1x1x41x128xf32> to vector<41x128xf32>
    %c0_3 = arith.constant 0 : index
    %c1 = arith.constant 1 : index
    %c0_4 = arith.constant 0 : index
    %c0_5 = arith.constant 0 : index
    %2 = vector.load %arg2[%c0_3, %c1, %c0_4, %c0_5] : memref<1x8x41x128xf32, #tpu.memory_space<vmem>>, vector<1x1x41x128xf32>
    %3 = vector.shape_cast %2 : vector<1x1x41x128xf32> to vector<41x128xf32>
    %c0_6 = arith.constant 0 : index
    %c2 = arith.constant 2 : index
    %c0_7 = arith.constant 0 : index
    %c0_8 = arith.constant 0 : index
    %4 = vector.load %arg2[%c0_6, %c2, %c0_7, %c0_8] : memref<1x8x41x128xf32, #tpu.memory_space<vmem>>, vector<1x1x41x128xf32>
    %5 = vector.shape_cast %4 : vector<1x1x41x128xf32> to vector<41x128xf32>
    %c0_9 = arith.constant 0 : index
    %c3 = arith.constant 3 : index
    %c0_10 = arith.constant 0 : index
    %c0_11 = arith.constant 0 : index
    %6 = vector.load %arg2[%c0_9, %c3, %c0_10, %c0_11] : memref<1x8x41x128xf32, #tpu.memory_space<vmem>>, vector<1x1x41x128xf32>
    %7 = vector.shape_cast %6 : vector<1x1x41x128xf32> to vector<41x128xf32>
    %c0_12 = arith.constant 0 : index
    %c4 = arith.constant 4 : index
    %c0_13 = arith.constant 0 : index
    %c0_14 = arith.constant 0 : index
    %8 = vector.load %arg2[%c0_12, %c4, %c0_13, %c0_14] : memref<1x8x41x128xf32, #tpu.memory_space<vmem>>, vector<1x1x41x128xf32>
    %9 = vector.shape_cast %8 : vector<1x1x41x128xf32> to vector<41x128xf32>
    %c0_15 = arith.constant 0 : index
    %c5 = arith.constant 5 : index
    %c0_16 = arith.constant 0 : index
    %c0_17 = arith.constant 0 : index
    %10 = vector.load %arg2[%c0_15, %c5, %c0_16, %c0_17] : memref<1x8x41x128xf32, #tpu.memory_space<vmem>>, vector<1x1x41x128xf32>
    %11 = vector.shape_cast %10 : vector<1x1x41x128xf32> to vector<41x128xf32>
    %c0_18 = arith.constant 0 : index
    %c6 = arith.constant 6 : index
    %c0_19 = arith.constant 0 : index
    %c0_20 = arith.constant 0 : index
    %12 = vector.load %arg2[%c0_18, %c6, %c0_19, %c0_20] : memref<1x8x41x128xf32, #tpu.memory_space<vmem>>, vector<1x1x41x128xf32>
    %13 = vector.shape_cast %12 : vector<1x1x41x128xf32> to vector<41x128xf32>
    %c0_21 = arith.constant 0 : index
    %c7 = arith.constant 7 : index
    %c0_22 = arith.constant 0 : index
    %c0_23 = arith.constant 0 : index
    %14 = vector.load %arg2[%c0_21, %c7, %c0_22, %c0_23] : memref<1x8x41x128xf32, #tpu.memory_space<vmem>>, vector<1x1x41x128xf32>
    %15 = vector.shape_cast %14 : vector<1x1x41x128xf32> to vector<41x128xf32>
    %16 = arith.mulf %1, %1 : vector<41x128xf32>
    %17 = arith.mulf %3, %3 : vector<41x128xf32>
    %18 = arith.addf %16, %17 : vector<41x128xf32>
    %19 = arith.mulf %5, %5 : vector<41x128xf32>
    %20 = arith.mulf %7, %7 : vector<41x128xf32>
    %21 = arith.addf %19, %20 : vector<41x128xf32>
    %cst = arith.constant dense<0xFF800000> : vector<128xf32>
    %22 = vector.multi_reduction <maximumf>, %18, %cst [0] : vector<41x128xf32> to vector<128xf32>
    %23 = vector.shape_cast %22 : vector<128xf32> to vector<1x128xf32>
    %cst_24 = arith.constant 0.00999999977 : f32
    %24 = vector.broadcast %cst_24 : f32 to vector<1x128xf32>
    %25 = arith.mulf %23, %24 : vector<1x128xf32>
    %cst_25 = arith.constant dense<0xFF800000> : vector<128xf32>
    %26 = vector.multi_reduction <maximumf>, %21, %cst_25 [0] : vector<41x128xf32> to vector<128xf32>
    %27 = vector.shape_cast %26 : vector<128xf32> to vector<1x128xf32>
    %cst_26 = arith.constant 0.00999999977 : f32
    %28 = vector.broadcast %cst_26 : f32 to vector<1x128xf32>
    %29 = arith.mulf %27, %28 : vector<1x128xf32>
    %30 = vector.broadcast %25 : vector<1x128xf32> to vector<41x128xf32>
    %31 = arith.cmpf ogt, %18, %30 : vector<41x128xf32>
    %32 = vector.broadcast %29 : vector<1x128xf32> to vector<41x128xf32>
    %33 = arith.cmpf ogt, %21, %32 : vector<41x128xf32>
    %34 = arith.andi %31, %33 : vector<41x128xi1>
    %cst_27 = arith.constant 1.000000e+00 : f32
    %cst_28 = arith.constant 0.000000e+00 : f32
    %35 = vector.broadcast %cst_27 : f32 to vector<41x128xf32>
    %36 = vector.broadcast %cst_28 : f32 to vector<41x128xf32>
    %37 = arith.select %34, %35, %36 : vector<41x128xi1>, vector<41x128xf32>
    %cst_29 = arith.constant 9.99999997E-7 : f32
    %38 = vector.broadcast %cst_29 : f32 to vector<41x128xf32>
    %39 = arith.addf %1, %38 : vector<41x128xf32>
    %cst_30 = arith.constant 9.99999997E-7 : f32
    %40 = vector.broadcast %cst_30 : f32 to vector<41x128xf32>
    %41 = arith.addf %5, %40 : vector<41x128xf32>
    %42 = arith.mulf %39, %41 : vector<41x128xf32>
    %43 = arith.mulf %3, %7 : vector<41x128xf32>
    %44 = arith.addf %42, %43 : vector<41x128xf32>
    %45 = arith.mulf %3, %41 : vector<41x128xf32>
    %46 = arith.mulf %39, %7 : vector<41x128xf32>
    %47 = arith.subf %45, %46 : vector<41x128xf32>
    %48 = math.absf %44 : vector<41x128xf32>
    %49 = math.absf %47 : vector<41x128xf32>
    %50 = arith.maximumf %48, %49 : vector<41x128xf32>
    %cst_31 = arith.constant 1.000000e-30 : f32
    %51 = vector.broadcast %cst_31 : f32 to vector<41x128xf32>
    %52 = arith.maximumf %50, %51 : vector<41x128xf32>
    %53 = arith.minimumf %48, %49 : vector<41x128xf32>
    %54 = tpu.reciprocal %52 {approx = true} : vector<41x128xf32> -> vector<41x128xf32>
    %55 = arith.mulf %52, %54 : vector<41x128xf32>
    %cst_32 = arith.constant 2.000000e+00 : f32
    %56 = vector.broadcast %cst_32 : f32 to vector<41x128xf32>
    %57 = arith.subf %56, %55 : vector<41x128xf32>
    %58 = arith.mulf %54, %57 : vector<41x128xf32>
    %59 = arith.mulf %53, %58 : vector<41x128xf32>
    %cst_33 = arith.constant 0.414213568 : f32
    %60 = vector.broadcast %cst_33 : f32 to vector<41x128xf32>
    %61 = arith.cmpf ogt, %59, %60 : vector<41x128xf32>
    %cst_34 = arith.constant 1.000000e+00 : f32
    %62 = vector.broadcast %cst_34 : f32 to vector<41x128xf32>
    %63 = arith.subf %59, %62 : vector<41x128xf32>
    %cst_35 = arith.constant 1.000000e+00 : f32
    %64 = vector.broadcast %cst_35 : f32 to vector<41x128xf32>
    %65 = arith.addf %59, %64 : vector<41x128xf32>
    %66 = tpu.reciprocal %65 {approx = true} : vector<41x128xf32> -> vector<41x128xf32>
    %67 = arith.mulf %65, %66 : vector<41x128xf32>
    %cst_36 = arith.constant 2.000000e+00 : f32
    %68 = vector.broadcast %cst_36 : f32 to vector<41x128xf32>
    %69 = arith.subf %68, %67 : vector<41x128xf32>
    %70 = arith.mulf %66, %69 : vector<41x128xf32>
    %71 = arith.mulf %63, %70 : vector<41x128xf32>
    %72 = arith.select %61, %71, %59 : vector<41x128xi1>, vector<41x128xf32>
    %cst_37 = arith.constant 0.785398185 : f32
    %cst_38 = arith.constant 0.000000e+00 : f32
    %73 = vector.broadcast %cst_37 : f32 to vector<41x128xf32>
    %74 = vector.broadcast %cst_38 : f32 to vector<41x128xf32>
    %75 = arith.select %61, %73, %74 : vector<41x128xi1>, vector<41x128xf32>
    %76 = arith.mulf %72, %72 : vector<41x128xf32>
    %cst_39 = arith.constant 0.0805374458 : f32
    %77 = vector.broadcast %cst_39 : f32 to vector<41x128xf32>
    %78 = arith.mulf %77, %76 : vector<41x128xf32>
    %cst_40 = arith.constant 0.138776854 : f32
    %79 = vector.broadcast %cst_40 : f32 to vector<41x128xf32>
    %80 = arith.subf %78, %79 : vector<41x128xf32>
    %81 = arith.mulf %80, %76 : vector<41x128xf32>
    %cst_41 = arith.constant 0.199777111 : f32
    %82 = vector.broadcast %cst_41 : f32 to vector<41x128xf32>
    %83 = arith.addf %81, %82 : vector<41x128xf32>
    %84 = arith.mulf %83, %76 : vector<41x128xf32>
    %cst_42 = arith.constant 0.333329499 : f32
    %85 = vector.broadcast %cst_42 : f32 to vector<41x128xf32>
    %86 = arith.subf %84, %85 : vector<41x128xf32>
    %87 = arith.mulf %86, %76 : vector<41x128xf32>
    %88 = arith.mulf %87, %72 : vector<41x128xf32>
    %89 = arith.addf %75, %88 : vector<41x128xf32>
    %90 = arith.addf %89, %72 : vector<41x128xf32>
    %91 = arith.cmpf ogt, %49, %48 : vector<41x128xf32>
    %cst_43 = arith.constant 1.57079637 : f32
    %92 = vector.broadcast %cst_43 : f32 to vector<41x128xf32>
    %93 = arith.subf %92, %90 : vector<41x128xf32>
    %94 = arith.select %91, %93, %90 : vector<41x128xi1>, vector<41x128xf32>
    %cst_44 = arith.constant 0.000000e+00 : f32
    %95 = vector.broadcast %cst_44 : f32 to vector<41x128xf32>
    %96 = arith.cmpf olt, %44, %95 : vector<41x128xf32>
    %cst_45 = arith.constant 3.14159274 : f32
    %97 = vector.broadcast %cst_45 : f32 to vector<41x128xf32>
    %98 = arith.subf %97, %94 : vector<41x128xf32>
    %99 = arith.select %96, %98, %94 : vector<41x128xi1>, vector<41x128xf32>
    %cst_46 = arith.constant 0.000000e+00 : f32
    %100 = vector.broadcast %cst_46 : f32 to vector<41x128xf32>
    %101 = arith.cmpf olt, %47, %100 : vector<41x128xf32>
    %cst_47 = arith.constant 0.000000e+00 : f32
    %102 = vector.broadcast %cst_47 : f32 to vector<41x128xf32>
    %103 = arith.subf %102, %99 : vector<41x128xf32>
    %104 = arith.select %101, %103, %99 : vector<41x128xi1>, vector<41x128xf32>
    %cst_48 = arith.constant 9.99999997E-7 : f32
    %105 = vector.broadcast %cst_48 : f32 to vector<41x128xf32>
    %106 = arith.addf %9, %105 : vector<41x128xf32>
    %cst_49 = arith.constant 9.99999997E-7 : f32
    %107 = vector.broadcast %cst_49 : f32 to vector<41x128xf32>
    %108 = arith.addf %13, %107 : vector<41x128xf32>
    %109 = arith.mulf %106, %108 : vector<41x128xf32>
    %110 = arith.mulf %11, %15 : vector<41x128xf32>
    %111 = arith.addf %109, %110 : vector<41x128xf32>
    %112 = arith.mulf %11, %108 : vector<41x128xf32>
    %113 = arith.mulf %106, %15 : vector<41x128xf32>
    %114 = arith.subf %112, %113 : vector<41x128xf32>
    %115 = math.absf %111 : vector<41x128xf32>
    %116 = math.absf %114 : vector<41x128xf32>
    %117 = arith.maximumf %115, %116 : vector<41x128xf32>
    %cst_50 = arith.constant 1.000000e-30 : f32
    %118 = vector.broadcast %cst_50 : f32 to vector<41x128xf32>
    %119 = arith.maximumf %117, %118 : vector<41x128xf32>
    %120 = arith.minimumf %115, %116 : vector<41x128xf32>
    %121 = tpu.reciprocal %119 {approx = true} : vector<41x128xf32> -> vector<41x128xf32>
    %122 = arith.mulf %119, %121 : vector<41x128xf32>
    %cst_51 = arith.constant 2.000000e+00 : f32
    %123 = vector.broadcast %cst_51 : f32 to vector<41x128xf32>
    %124 = arith.subf %123, %122 : vector<41x128xf32>
    %125 = arith.mulf %121, %124 : vector<41x128xf32>
    %126 = arith.mulf %120, %125 : vector<41x128xf32>
    %cst_52 = arith.constant 0.414213568 : f32
    %127 = vector.broadcast %cst_52 : f32 to vector<41x128xf32>
    %128 = arith.cmpf ogt, %126, %127 : vector<41x128xf32>
    %cst_53 = arith.constant 1.000000e+00 : f32
    %129 = vector.broadcast %cst_53 : f32 to vector<41x128xf32>
    %130 = arith.subf %126, %129 : vector<41x128xf32>
    %cst_54 = arith.constant 1.000000e+00 : f32
    %131 = vector.broadcast %cst_54 : f32 to vector<41x128xf32>
    %132 = arith.addf %126, %131 : vector<41x128xf32>
    %133 = tpu.reciprocal %132 {approx = true} : vector<41x128xf32> -> vector<41x128xf32>
    %134 = arith.mulf %132, %133 : vector<41x128xf32>
    %cst_55 = arith.constant 2.000000e+00 : f32
    %135 = vector.broadcast %cst_55 : f32 to vector<41x128xf32>
    %136 = arith.subf %135, %134 : vector<41x128xf32>
    %137 = arith.mulf %133, %136 : vector<41x128xf32>
    %138 = arith.mulf %130, %137 : vector<41x128xf32>
    %139 = arith.select %128, %138, %126 : vector<41x128xi1>, vector<41x128xf32>
    %cst_56 = arith.constant 0.785398185 : f32
    %cst_57 = arith.constant 0.000000e+00 : f32
    %140 = vector.broadcast %cst_56 : f32 to vector<41x128xf32>
    %141 = vector.broadcast %cst_57 : f32 to vector<41x128xf32>
    %142 = arith.select %128, %140, %141 : vector<41x128xi1>, vector<41x128xf32>
    %143 = arith.mulf %139, %139 : vector<41x128xf32>
    %cst_58 = arith.constant 0.0805374458 : f32
    %144 = vector.broadcast %cst_58 : f32 to vector<41x128xf32>
    %145 = arith.mulf %144, %143 : vector<41x128xf32>
    %cst_59 = arith.constant 0.138776854 : f32
    %146 = vector.broadcast %cst_59 : f32 to vector<41x128xf32>
    %147 = arith.subf %145, %146 : vector<41x128xf32>
    %148 = arith.mulf %147, %143 : vector<41x128xf32>
    %cst_60 = arith.constant 0.199777111 : f32
    %149 = vector.broadcast %cst_60 : f32 to vector<41x128xf32>
    %150 = arith.addf %148, %149 : vector<41x128xf32>
    %151 = arith.mulf %150, %143 : vector<41x128xf32>
    %cst_61 = arith.constant 0.333329499 : f32
    %152 = vector.broadcast %cst_61 : f32 to vector<41x128xf32>
    %153 = arith.subf %151, %152 : vector<41x128xf32>
    %154 = arith.mulf %153, %143 : vector<41x128xf32>
    %155 = arith.mulf %154, %139 : vector<41x128xf32>
    %156 = arith.addf %142, %155 : vector<41x128xf32>
    %157 = arith.addf %156, %139 : vector<41x128xf32>
    %158 = arith.cmpf ogt, %116, %115 : vector<41x128xf32>
    %cst_62 = arith.constant 1.57079637 : f32
    %159 = vector.broadcast %cst_62 : f32 to vector<41x128xf32>
    %160 = arith.subf %159, %157 : vector<41x128xf32>
    %161 = arith.select %158, %160, %157 : vector<41x128xi1>, vector<41x128xf32>
    %cst_63 = arith.constant 0.000000e+00 : f32
    %162 = vector.broadcast %cst_63 : f32 to vector<41x128xf32>
    %163 = arith.cmpf olt, %111, %162 : vector<41x128xf32>
    %cst_64 = arith.constant 3.14159274 : f32
    %164 = vector.broadcast %cst_64 : f32 to vector<41x128xf32>
    %165 = arith.subf %164, %161 : vector<41x128xf32>
    %166 = arith.select %163, %165, %161 : vector<41x128xi1>, vector<41x128xf32>
    %cst_65 = arith.constant 0.000000e+00 : f32
    %167 = vector.broadcast %cst_65 : f32 to vector<41x128xf32>
    %168 = arith.cmpf olt, %114, %167 : vector<41x128xf32>
    %cst_66 = arith.constant 0.000000e+00 : f32
    %169 = vector.broadcast %cst_66 : f32 to vector<41x128xf32>
    %170 = arith.subf %169, %166 : vector<41x128xf32>
    %171 = arith.select %168, %170, %166 : vector<41x128xi1>, vector<41x128xf32>
    %172 = arith.subf %104, %171 : vector<41x128xf32>
    %173 = math.absf %172 : vector<41x128xf32>
    %174 = arith.mulf %173, %37 : vector<41x128xf32>
    %175 = vector.shape_cast %174 : vector<41x128xf32> to vector<1x41x128xf32>
    %cst_67 = arith.constant dense<0.000000e+00> : vector<1xf32>
    %176 = vector.multi_reduction <add>, %175, %cst_67 [1, 2] : vector<1x41x128xf32> to vector<1xf32>
    %177 = vector.shape_cast %176 : vector<1xf32> to vector<1x1x1xf32>
    %178 = vector.extract %177[0, 0, 0] : f32 from vector<1x1x1xf32>
    %179 = vector.shape_cast %37 : vector<41x128xf32> to vector<1x41x128xf32>
    %cst_68 = arith.constant dense<0.000000e+00> : vector<1xf32>
    %180 = vector.multi_reduction <add>, %179, %cst_68 [1, 2] : vector<1x41x128xf32> to vector<1xf32>
    %181 = vector.shape_cast %180 : vector<1xf32> to vector<1x1x1xf32>
    %182 = vector.extract %181[0, 0, 0] : f32 from vector<1x1x1xf32>
    %cst_69 = arith.constant 0.000000e+00 : f32
    %183 = vector.broadcast %cst_69 : f32 to vector<1x1x8x128xf32>
    %184 = vector.broadcast %178 : f32 to vector<1x1x8x128xf32>
    %185 = arith.addf %183, %184 : vector<1x1x8x128xf32>
    %c0_70 = arith.constant 0 : index
    %c0_71 = arith.constant 0 : index
    %c0_72 = arith.constant 0 : index
    %c0_73 = arith.constant 0 : index
    %186 = vector.load %arg3[%c0_70, %c0_71, %c0_72, %c0_73] : memref<1x1x8x128xf32, #tpu.memory_space<vmem>>, vector<1x1x8x128xf32>
    tpu.vector_store %arg3[%c0_70, %c0_71, %c0_72, %c0_73], %185 {strides = array<i32>} : memref<1x1x8x128xf32, #tpu.memory_space<vmem>>, vector<1x1x8x128xf32>,
    %cst_74 = arith.constant 0.000000e+00 : f32
    %187 = vector.broadcast %cst_74 : f32 to vector<1x1x8x128xf32>
    %188 = vector.broadcast %182 : f32 to vector<1x1x8x128xf32>
    %189 = arith.addf %187, %188 : vector<1x1x8x128xf32>
    %c0_75 = arith.constant 0 : index
    %c0_76 = arith.constant 0 : index
    %c0_77 = arith.constant 0 : index
    %c0_78 = arith.constant 0 : index
    %190 = vector.load %arg4[%c0_75, %c0_76, %c0_77, %c0_78] : memref<1x1x8x128xf32, #tpu.memory_space<vmem>>, vector<1x1x8x128xf32>
    tpu.vector_store %arg4[%c0_75, %c0_76, %c0_77, %c0_78], %189 {strides = array<i32>} : memref<1x1x8x128xf32, #tpu.memory_space<vmem>>, vector<1x1x8x128xf32>,
    return
  }
  func.func @transform_0(%arg0: i32, %arg1: i32) -> (i32, i32, i32, i32) {
    %c0_i32 = arith.constant 0 : i32
    %c0_i32_0 = arith.constant 0 : i32
    %c0_i32_1 = arith.constant 0 : i32
    return %arg0, %c0_i32, %c0_i32_0, %arg1 : i32, i32, i32, i32
  }
  func.func @transform_1(%arg0: i32, %arg1: i32) -> (i32, i32, i32, i32) {
    %c0_i32 = arith.constant 0 : i32
    %c0_i32_0 = arith.constant 0 : i32
    %c0_i32_1 = arith.constant 0 : i32
    return %arg0, %arg1, %c0_i32, %c0_i32_0 : i32, i32, i32, i32
  }
  func.func @transform_2(%arg0: i32, %arg1: i32) -> (i32, i32, i32, i32) {
    %c0_i32 = arith.constant 0 : i32
    %c0_i32_0 = arith.constant 0 : i32
    %c0_i32_1 = arith.constant 0 : i32
    return %arg0, %arg1, %c0_i32, %c0_i32_0 : i32, i32, i32, i32
  }
}

</mosaic_0001>

<llo_original>
// kernel: binaural_loss.1
$region0: #{binaural_loss.1}
  #allocation0 [shape = 'u32[]', space=smem, size = 0x4, offset = 0x4, fixed_abs, tag = 'smem constant byte address 0x4 - core index']
  #allocation1 [shape = 'u32[144,128]{1,0:T(1,128)}', space=vmem, size = 0x12000, scoped, tag = 'internal scratch']
  %s0 = inlined_call_operand.vmem [shape: f32[2,8,41,384], index: 0, kind: input, shape index: {}]
  %s1 = inlined_call_operand.vmem [shape: f32[2,3,8,128], index: 1, kind: output, shape index: {0}]
  %s2 = inlined_call_operand.vmem [shape: f32[2,3,8,128], index: 2, kind: output, shape index: {1}]
  %3 = xla_tuple %s1, %s2
  %s4 = sld [smem:[#allocation0]]
  $region83: #{binaural_loss.1} parent=0
    _
  %s6 = ssub.s32 1, %s4
  %s7 = scalar_select 0, %s6, %s4
  $region1: #{binaural_loss.1} parent=0
    #allocation2 [shape = 'u8[393216]{0}', space=vmem, size = 0x60000, scoped, tag = 'input window, operand 0']
    loop: start=0, step=1, limit=8
    $region2: #{binaural_loss.1} parent=1 // loop_pre_header
      _
    $region3: #{binaural_loss.1} parent=1 // loop_header
      %s9 = sphi 0, %s13
      %p10 = scmp.ge.s32.totalorder %s9, 8
      %s16 = sphi 0, %s28
      %s17 = sphi 0, %s24
      %s18 = sphi 0, %s16
      %s19 = sphi 0, %s17
      %s20 = sphi 0, %s18
      %s21 = sphi 0, %s19
      %s33 = sphi 0, %s35
      %s36 = sphi 0, %s33
      %s37 = sphi 0, %s36
      %s53 = sphi 0, %s37
      %s61 = sphi 0, %s63
      %s64 = sphi 0, %s61
      %s65 = sphi 0, %s64
      %s81 = sphi 0, %s65
      %s89 = sphi 0, %s91
      %s92 = sphi 0, %s89
      %s93 = sphi 0, %s92
      %s109 = sphi 0, %s93
    $region4: #{binaural_loss.1} parent=1 // loop_header_branch
      %12 = sbr.rel (%p10) target = $region8
    $region5: #{binaural_loss.1} parent=1 // loop_body
      %s14 = ssub.s32 %s9, 1
      %s15 = ssub.s32 %s9, 2
      %s22 = sadd.s32 1, %s17
      %p23 = scmp.ge.s32.totalorder %s22, 3
      %s24 = scalar_select %p23, 0, %s22
      %s25 = sadd.s32 1, %s16
      %s26 = scalar_select %p23, %s25, %s16
      %p27 = scmp.ge.s32.totalorder %s26, 2
      %s28 = scalar_select %p27, 0, %s26
      %s29 = ssub.s32 %s16, %s28
      %s30 = ssub.s32 %s17, %s24
      %s31 = sor.u32 %s29, %s30
      %p32 = scmp.eq.s32.totalorder %s31, 0
      %s34 = sadd.s32 %s33, 1
      %s35 = scalar_select %p32, %s33, %s34
      %p38 = pneg %p32
      %p39 = scmp.eq.s32.totalorder %s9, 5
      %p40 = por %p38, %p39
      %p41 = scmp.ne.s32.totalorder %s33, %s36
      %p42 = scmp.eq.s32.totalorder %s9, 0
      %p43 = por %p41, %p42
      %p44 = scmp.ne.s32.totalorder %s33, %s36
      %p45 = scmp.eq.s32.totalorder %s14, 5
      %p46 = por %p44, %p45
      %p47 = scmp.ne.s32.totalorder %s36, %s37
      %p48 = scmp.eq.s32.totalorder %s14, 0
      %p49 = por %p47, %p48
      %p50 = scmp.ne.s32.totalorder %s36, %s37
      %p51 = scmp.eq.s32.totalorder %s15, 5
      %p52 = por %p50, %p51
      %p54 = scmp.ne.s32.totalorder %s37, %s53
      %p55 = scmp.eq.s32.totalorder %s15, 0
      %p56 = por %p54, %p55
      %s57 = ssub.s32 %s16, %s28
      %s58 = ssub.s32 %s17, %s24
      %s59 = sor.u32 %s57, %s58
      %p60 = scmp.eq.s32.totalorder %s59, 0
      %s62 = sadd.s32 %s61, 1
      %s63 = scalar_select %p60, %s61, %s62
      %p66 = pneg %p60
      %p67 = scmp.eq.s32.totalorder %s9, 5
      %p68 = por %p66, %p67
      %p69 = scmp.ne.s32.totalorder %s61, %s64
      %p70 = scmp.eq.s32.totalorder %s9, 0
      %p71 = por %p69, %p70
      %p72 = scmp.ne.s32.totalorder %s61, %s64
      %p73 = scmp.eq.s32.totalorder %s14, 5
      %p74 = por %p72, %p73
      %p75 = scmp.ne.s32.totalorder %s64, %s65
      %p76 = scmp.eq.s32.totalorder %s14, 0
      %p77 = por %p75, %p76
      %p78 = scmp.ne.s32.totalorder %s64, %s65
      %p79 = scmp.eq.s32.totalorder %s15, 5
      %p80 = por %p78, %p79
      %p82 = scmp.ne.s32.totalorder %s65, %s81
      %p83 = scmp.eq.s32.totalorder %s15, 0
      %p84 = por %p82, %p83
      %s85 = ssub.s32 %s16, %s28
      %s86 = ssub.s32 %s17, %s24
      %s87 = sor.u32 %s85, %s86
      %p88 = scmp.eq.s32.totalorder %s87, 0
      %s90 = sadd.s32 %s89, 1
      %s91 = scalar_select %p88, %s89, %s90
      %p94 = pneg %p88
      %p95 = scmp.eq.s32.totalorder %s9, 5
      %p96 = por %p94, %p95
      %p97 = scmp.ne.s32.totalorder %s89, %s92
      %p98 = scmp.eq.s32.totalorder %s9, 0
      %p99 = por %p97, %p98
      %p100 = scmp.ne.s32.totalorder %s89, %s92
      %p101 = scmp.eq.s32.totalorder %s14, 5
      %p102 = por %p100, %p101
      %p103 = scmp.ne.s32.totalorder %s92, %s93
      %p104 = scmp.eq.s32.totalorder %s14, 0
      %p105 = por %p103, %p104
      %p106 = scmp.ne.s32.totalorder %s92, %s93
      %p107 = scmp.eq.s32.totalorder %s15, 5
      %p108 = por %p106, %p107
      %p110 = scmp.ne.s32.totalorder %s93, %s109
      %p111 = scmp.eq.s32.totalorder %s15, 0
      %p112 = por %p110, %p111
      %p113 = scmp.le.s32.totalorder 1, %s9
      %p114 = scmp.lt.s32.totalorder %s9, 7
      %p115 = pnand %p113, %p114
      %p116 = pneg %p115
      // Predicated region
      $region9: #{binaural_loss.1} parent=5 // pred_check
        _
      $region10: #{binaural_loss.1} parent=5 // pred_check_branch
        %118 = sbr.rel (%p115) target = $region12
      $region11: #{binaural_loss.1} parent=5 // pred_region
        %s119 = ssub.s32 %s9, 1
      $region12: #{binaural_loss.1} parent=5 // pred_fallthru
        _
      %p120 = scmp.lt.s32.totalorder %s9, 6
      // Predicated region
      $region13: #{binaural_loss.1} parent=5 // pred_check
        %p121 = pneg %p120
      $region14: #{binaural_loss.1} parent=5 // pred_check_branch
        %123 = sbr.rel (%p121) target = $region16
      $region15: #{binaural_loss.1} parent=5 // pred_region
        // Predicated region
        $region17: #{binaural_loss.1} parent=15 // pred_check
          %p124 = pneg %p43
        $region18: #{binaural_loss.1} parent=15 // pred_check_branch
          %126 = sbr.rel (%p124) target = $region20
        $region19: #{binaural_loss.1} parent=15 // pred_region
          %s127 = sand.u32 %s33, 1
          %s128 = sand.u32 %s33, 1
          %s129 = smul.addr %s128, 384
          %s130 = scalar_lea.vmem [#allocation2], %s129
          %s131 = smul.addr %s16, 144
          %s132 = sadd.s32 %s17, %s131
          %s133 = smul.addr %s132, 8
          %s134 = scalar_lea.vmem %s0, %s133
          // Predicated region
          $region21: #{binaural_loss.1} parent=19 // pred_check
            _
          $region22: #{binaural_loss.1} parent=19 // pred_check_branch
            %136 = sbr.rel (0) target = $region24
          $region23: #{binaural_loss.1} parent=19 // pred_region
            // Predicated region
            $region25: #{binaural_loss.1} parent=23 // pred_check
              _
            $region26: #{binaural_loss.1} parent=23 // pred_check_branch
              %138 = sbr.rel (0) target = $region28
            $region27: #{binaural_loss.1} parent=23 // pred_region
              // Predicated region
              $region40: #{binaural_loss.1} parent=27 // pred_check
                _
              $region41: #{binaural_loss.1} parent=27 // pred_check_branch
                %247 = sbr.rel (0) target = $region43
              $region42: #{binaural_loss.1} parent=27 // pred_region
                loop: start=0, step=1, limit=1
                $region44: #{binaural_loss.1} parent=42 // loop_pre_header
                  _
                $region45: #{binaural_loss.1} parent=42 // loop_header
                  %s249 = sphi 0, %s253
                  %p250 = scmp.ge.s32.totalorder %s249, 1
                  %s254 = sphi %s134, %s134
                  %s255 = sphi %s130, %s130
                $region46: #{binaural_loss.1} parent=42 // loop_header_branch
                  %252 = sbr.rel (%p250) target = $region50
                $region47: #{binaural_loss.1} parent=42 // loop_body
                  %v256 = vld [vmem:[%s254] sm:$0xff]
                  %257 = vst [vmem:[%s255] sm:$0xff] %v256
                  %v258 = vld [vmem:[%s254 + $0x18] sm:$0xff]
                  %259 = vst [vmem:[%s255 + $0x8] sm:$0xff] %v258
                  %v260 = vld [vmem:[%s254 + $0x30] sm:$0xff]
                  %261 = vst [vmem:[%s255 + $0x10] sm:$0xff] %v260
                  %v262 = vld [vmem:[%s254 + $0x48] sm:$0xff]
                  %263 = vst [vmem:[%s255 + $0x18] sm:$0xff] %v262
                  %v264 = vld [vmem:[%s254 + $0x60] sm:$0xff]
                  %265 = vst [vmem:[%s255 + $0x20] sm:$0xff] %v264
                  %v266 = vld [vmem:[%s254 + $0x78] sm:$0xff]
                  %267 = vst [vmem:[%s255 + $0x28] sm:$0xff] %v266
                  %v268 = vld [vmem:[%s254 + $0x90] sm:$0xff]
                  %269 = vst [vmem:[%s255 + $0x30] sm:$0xff] %v268
                  %v270 = vld [vmem:[%s254 + $0xa8] sm:$0xff]
                  %271 = vst [vmem:[%s255 + $0x38] sm:$0xff] %v270
                  %v272 = vld [vmem:[%s254 + $0xc0] sm:$0xff]
                  %273 = vst [vmem:[%s255 + $0x40] sm:$0xff] %v272
                  %v274 = vld [vmem:[%s254 + $0xd8] sm:$0xff]
                  %275 = vst [vmem:[%s255 + $0x48] sm:$0xff] %v274
                  %v276 = vld [vmem:[%s254 + $0xf0] sm:$0xff]
                  %277 = vst [vmem:[%s255 + $0x50] sm:$0xff] %v276
                  %v278 = vld [vmem:[%s254 + $0x108] sm:$0xff]
                  %279 = vst [vmem:[%s255 + $0x58] sm:$0xff] %v278
                  %v280 = vld [vmem:[%s254 + $0x120] sm:$0xff]
                  %281 = vst [vmem:[%s255 + $0x60] sm:$0xff] %v280
                  %v282 = vld [vmem:[%s254 + $0x138] sm:$0xff]
                  %283 = vst [vmem:[%s255 + $0x68] sm:$0xff] %v282
                  %v284 = vld [vmem:[%s254 + $0x150] sm:$0xff]
                  %285 = vst [vmem:[%s255 + $0x70] sm:$0xff] %v284
                  %v286 = vld [vmem:[%s254 + $0x168] sm:$0xff]
                  %287 = vst [vmem:[%s255 + $0x78] sm:$0xff] %v286
                  %v288 = vld [vmem:[%s254 + $0x180] sm:$0xff]
                  %289 = vst [vmem:[%s255 + $0x80] sm:$0xff] %v288
                  %v290 = vld [vmem:[%s254 + $0x198] sm:$0xff]
                  %291 = vst [vmem:[%s255 + $0x88] sm:$0xff] %v290
                  %v292 = vld [vmem:[%s254 + $0x1b0] sm:$0xff]
                  %293 = vst [vmem:[%s255 + $0x90] sm:$0xff] %v292
                  %v294 = vld [vmem:[%s254 + $0x1c8] sm:$0xff]
                  %295 = vst [vmem:[%s255 + $0x98] sm:$0xff] %v294
                  %v296 = vld [vmem:[%s254 + $0x1e0] sm:$0xff]
                  %297 = vst [vmem:[%s255 + $0xa0] sm:$0xff] %v296
                  %v298 = vld [vmem:[%s254 + $0x1f8] sm:$0xff]
                  %299 = vst [vmem:[%s255 + $0xa8] sm:$0xff] %v298
                  %v300 = vld [vmem:[%s254 + $0x210] sm:$0xff]
                  %301 = vst [vmem:[%s255 + $0xb0] sm:$0xff] %v300
                  %v302 = vld [vmem:[%s254 + $0x228] sm:$0xff]
                  %303 = vst [vmem:[%s255 + $0xb8] sm:$0xff] %v302
                  %v304 = vld [vmem:[%s254 + $0x240] sm:$0xff]
                  %305 = vst [vmem:[%s255 + $0xc0] sm:$0xff] %v304
                  %v306 = vld [vmem:[%s254 + $0x258] sm:$0xff]
                  %307 = vst [vmem:[%s255 + $0xc8] sm:$0xff] %v306
                  %v308 = vld [vmem:[%s254 + $0x270] sm:$0xff]
                  %309 = vst [vmem:[%s255 + $0xd0] sm:$0xff] %v308
                  %v310 = vld [vmem:[%s254 + $0x288] sm:$0xff]
                  %311 = vst [vmem:[%s255 + $0xd8] sm:$0xff] %v310
                  %v312 = vld [vmem:[%s254 + $0x2a0] sm:$0xff]
                  %313 = vst [vmem:[%s255 + $0xe0] sm:$0xff] %v312
                  %v314 = vld [vmem:[%s254 + $0x2b8] sm:$0xff]
                  %315 = vst [vmem:[%s255 + $0xe8] sm:$0xff] %v314
                  %v316 = vld [vmem:[%s254 + $0x2d0] sm:$0xff]
                  %317 = vst [vmem:[%s255 + $0xf0] sm:$0xff] %v316
                  %v318 = vld [vmem:[%s254 + $0x2e8] sm:$0xff]
                  %319 = vst [vmem:[%s255 + $0xf8] sm:$0xff] %v318
                  %v320 = vld [vmem:[%s254 + $0x300] sm:$0xff]
                  %321 = vst [vmem:[%s255 + $0x100] sm:$0xff] %v320
                  %v322 = vld [vmem:[%s254 + $0x318] sm:$0xff]
                  %323 = vst [vmem:[%s255 + $0x108] sm:$0xff] %v322
                  %v324 = vld [vmem:[%s254 + $0x330] sm:$0xff]
                  %325 = vst [vmem:[%s255 + $0x110] sm:$0xff] %v324
                  %v326 = vld [vmem:[%s254 + $0x348] sm:$0xff]
                  %327 = vst [vmem:[%s255 + $0x118] sm:$0xff] %v326
                  %v328 = vld [vmem:[%s254 + $0x360] sm:$0xff]
                  %329 = vst [vmem:[%s255 + $0x120] sm:$0xff] %v328
                  %v330 = vld [vmem:[%s254 + $0x378] sm:$0xff]
                  %331 = vst [vmem:[%s255 + $0x128] sm:$0xff] %v330
                  %v332 = vld [vmem:[%s254 + $0x390] sm:$0xff]
                  %333 = vst [vmem:[%s255 + $0x130] sm:$0xff] %v332
                  %v334 = vld [vmem:[%s254 + $0x3a8] sm:$0xff]
                  %335 = vst [vmem:[%s255 + $0x138] sm:$0xff] %v334
                  %v336 = vld [vmem:[%s254 + $0x3c0] sm:$0xff]
                  %337 = vst [vmem:[%s255 + $0x140] sm:$0xff] %v336
                  %v338 = vld [vmem:[%s254 + $0x3d8] sm:$0xff]
                  %339 = vst [vmem:[%s255 + $0x148] sm:$0xff] %v338
                  %v340 = vld [vmem:[%s254 + $0x3f0] sm:$0xff]
                  %341 = vst [vmem:[%s255 + $0x150] sm:$0xff] %v340
                  %v342 = vld [vmem:[%s254 + $0x408] sm:$0xff]
                  %343 = vst [vmem:[%s255 + $0x158] sm:$0xff] %v342
                  %v344 = vld [vmem:[%s254 + $0x420] sm:$0xff]
                  %345 = vst [vmem:[%s255 + $0x160] sm:$0xff] %v344
                  %v346 = vld [vmem:[%s254 + $0x438] sm:$0xff]
                  %347 = vst [vmem:[%s255 + $0x168] sm:$0xff] %v346
                  %v348 = vld [vmem:[%s254 + $0x450] sm:$0xff]
                  %349 = vst [vmem:[%s255 + $0x170] sm:$0xff] %v348
                  %v350 = vld [vmem:[%s254 + $0x468] sm:$0xff]
                  %351 = vst [vmem:[%s255 + $0x178] sm:$0xff] %v350
                $region48: #{binaural_loss.1} parent=42 // loop_footer
                  %s253 = sadd.s32 1, %s249
                $region49: #{binaural_loss.1} parent=42 // loop_footer_branch
                  %248 = sbr.rel target = $region45
                $region50: #{binaural_loss.1} parent=42 // loop_exit
                  _
              $region43: #{binaural_loss.1} parent=27 // pred_fallthru
                _
              // Predicated region
              $region51: #{binaural_loss.1} parent=27 // pred_check
                _
              $region52: #{binaural_loss.1} parent=27 // pred_check_branch
                %353 = sbr.rel target = $region54
              $region53: #{binaural_loss.1} parent=27 // pred_region
                _
              $region54: #{binaural_loss.1} parent=27 // pred_fallthru
                _
            $region28: #{binaural_loss.1} parent=23 // pred_fallthru
              _
            // Predicated region
            $region29: #{binaural_loss.1} parent=23 // pred_check
              _
            $region30: #{binaural_loss.1} parent=23 // pred_check_branch
              %140 = sbr.rel target = $region32
            $region31: #{binaural_loss.1} parent=23 // pred_region
              loop: start=0, step=1, limit=1
              $region33: #{binaural_loss.1} parent=31 // loop_pre_header
                _
              $region34: #{binaural_loss.1} parent=31 // loop_header
                %s143 = sphi 0, %s147
                %p144 = scmp.ge.s32.totalorder %s143, 1
                %s148 = sphi %s134, %s134
                %s149 = sphi %s130, %s130
              $region35: #{binaural_loss.1} parent=31 // loop_header_branch
                %146 = sbr.rel (%p144) target = $region39
              $region36: #{binaural_loss.1} parent=31 // loop_body
                %v150 = vld [vmem:[%s148] sm:$0xff]
                %151 = vst [vmem:[%s149] sm:$0xff] %v150
                %v152 = vld [vmem:[%s148 + $0x18] sm:$0xff]
                %153 = vst [vmem:[%s149 + $0x8] sm:$0xff] %v152
                %v154 = vld [vmem:[%s148 + $0x30] sm:$0xff]
                %155 = vst [vmem:[%s149 + $0x10] sm:$0xff] %v154
                %v156 = vld [vmem:[%s148 + $0x48] sm:$0xff]
                %157 = vst [vmem:[%s149 + $0x18] sm:$0xff] %v156
                %v158 = vld [vmem:[%s148 + $0x60] sm:$0xff]
                %159 = vst [vmem:[%s149 + $0x20] sm:$0xff] %v158
                %v160 = vld [vmem:[%s148 + $0x78] sm:$0xff]
                %161 = vst [vmem:[%s149 + $0x28] sm:$0xff] %v160
                %v162 = vld [vmem:[%s148 + $0x90] sm:$0xff]
                %163 = vst [vmem:[%s149 + $0x30] sm:$0xff] %v162
                %v164 = vld [vmem:[%s148 + $0xa8] sm:$0xff]
                %165 = vst [vmem:[%s149 + $0x38] sm:$0xff] %v164
                %v166 = vld [vmem:[%s148 + $0xc0] sm:$0xff]
                %167 = vst [vmem:[%s149 + $0x40] sm:$0xff] %v166
                %v168 = vld [vmem:[%s148 + $0xd8] sm:$0xff]
                %169 = vst [vmem:[%s149 + $0x48] sm:$0xff] %v168
                %v170 = vld [vmem:[%s148 + $0xf0] sm:$0xff]
                %171 = vst [vmem:[%s149 + $0x50] sm:$0xff] %v170
                %v172 = vld [vmem:[%s148 + $0x108] sm:$0xff]
                %173 = vst [vmem:[%s149 + $0x58] sm:$0xff] %v172
                %v174 = vld [vmem:[%s148 + $0x120] sm:$0xff]
                %175 = vst [vmem:[%s149 + $0x60] sm:$0xff] %v174
                %v176 = vld [vmem:[%s148 + $0x138] sm:$0xff]
                %177 = vst [vmem:[%s149 + $0x68] sm:$0xff] %v176
                %v178 = vld [vmem:[%s148 + $0x150] sm:$0xff]
                %179 = vst [vmem:[%s149 + $0x70] sm:$0xff] %v178
                %v180 = vld [vmem:[%s148 + $0x168] sm:$0xff]
                %181 = vst [vmem:[%s149 + $0x78] sm:$0xff] %v180
                %v182 = vld [vmem:[%s148 + $0x180] sm:$0xff]
                %183 = vst [vmem:[%s149 + $0x80] sm:$0xff] %v182
                %v184 = vld [vmem:[%s148 + $0x198] sm:$0xff]
                %185 = vst [vmem:[%s149 + $0x88] sm:$0xff] %v184
                %v186 = vld [vmem:[%s148 + $0x1b0] sm:$0xff]
                %187 = vst [vmem:[%s149 + $0x90] sm:$0xff] %v186
                %v188 = vld [vmem:[%s148 + $0x1c8] sm:$0xff]
                %189 = vst [vmem:[%s149 + $0x98] sm:$0xff] %v188
                %v190 = vld [vmem:[%s148 + $0x1e0] sm:$0xff]
                %191 = vst [vmem:[%s149 + $0xa0] sm:$0xff] %v190
                %v192 = vld [vmem:[%s148 + $0x1f8] sm:$0xff]
                %193 = vst [vmem:[%s149 + $0xa8] sm:$0xff] %v192
                %v194 = vld [vmem:[%s148 + $0x210] sm:$0xff]
                %195 = vst [vmem:[%s149 + $0xb0] sm:$0xff] %v194
                %v196 = vld [vmem:[%s148 + $0x228] sm:$0xff]
                %197 = vst [vmem:[%s149 + $0xb8] sm:$0xff] %v196
                %v198 = vld [vmem:[%s148 + $0x240] sm:$0xff]
                %199 = vst [vmem:[%s149 + $0xc0] sm:$0xff] %v198
                %v200 = vld [vmem:[%s148 + $0x258] sm:$0xff]
                %201 = vst [vmem:[%s149 + $0xc8] sm:$0xff] %v200
                %v202 = vld [vmem:[%s148 + $0x270] sm:$0xff]
                %203 = vst [vmem:[%s149 + $0xd0] sm:$0xff] %v202
                %v204 = vld [vmem:[%s148 + $0x288] sm:$0xff]
                %205 = vst [vmem:[%s149 + $0xd8] sm:$0xff] %v204
                %v206 = vld [vmem:[%s148 + $0x2a0] sm:$0xff]
                %207 = vst [vmem:[%s149 + $0xe0] sm:$0xff] %v206
                %v208 = vld [vmem:[%s148 + $0x2b8] sm:$0xff]
                %209 = vst [vmem:[%s149 + $0xe8] sm:$0xff] %v208
                %v210 = vld [vmem:[%s148 + $0x2d0] sm:$0xff]
                %211 = vst [vmem:[%s149 + $0xf0] sm:$0xff] %v210
                %v212 = vld [vmem:[%s148 + $0x2e8] sm:$0xff]
                %213 = vst [vmem:[%s149 + $0xf8] sm:$0xff] %v212
                %v214 = vld [vmem:[%s148 + $0x300] sm:$0xff]
                %215 = vst [vmem:[%s149 + $0x100] sm:$0xff] %v214
                %v216 = vld [vmem:[%s148 + $0x318] sm:$0xff]
                %217 = vst [vmem:[%s149 + $0x108] sm:$0xff] %v216
                %v218 = vld [vmem:[%s148 + $0x330] sm:$0xff]
                %219 = vst [vmem:[%s149 + $0x110] sm:$0xff] %v218
                %v220 = vld [vmem:[%s148 + $0x348] sm:$0xff]
                %221 = vst [vmem:[%s149 + $0x118] sm:$0xff] %v220
                %v222 = vld [vmem:[%s148 + $0x360] sm:$0xff]
                %223 = vst [vmem:[%s149 + $0x120] sm:$0xff] %v222
                %v224 = vld [vmem:[%s148 + $0x378] sm:$0xff]
                %225 = vst [vmem:[%s149 + $0x128] sm:$0xff] %v224
                %v226 = vld [vmem:[%s148 + $0x390] sm:$0xff]
                %227 = vst [vmem:[%s149 + $0x130] sm:$0xff] %v226
                %v228 = vld [vmem:[%s148 + $0x3a8] sm:$0xff]
                %229 = vst [vmem:[%s149 + $0x138] sm:$0xff] %v228
                %v230 = vld [vmem:[%s148 + $0x3c0] sm:$0xff]
                %231 = vst [vmem:[%s149 + $0x140] sm:$0xff] %v230
                %v232 = vld [vmem:[%s148 + $0x3d8] sm:$0xff]
                %233 = vst [vmem:[%s149 + $0x148] sm:$0xff] %v232
                %v234 = vld [vmem:[%s148 + $0x3f0] sm:$0xff]
                %235 = vst [vmem:[%s149 + $0x150] sm:$0xff] %v234
                %v236 = vld [vmem:[%s148 + $0x408] sm:$0xff]
                %237 = vst [vmem:[%s149 + $0x158] sm:$0xff] %v236
                %v238 = vld [vmem:[%s148 + $0x420] sm:$0xff]
                %239 = vst [vmem:[%s149 + $0x160] sm:$0xff] %v238
                %v240 = vld [vmem:[%s148 + $0x438] sm:$0xff]
                %241 = vst [vmem:[%s149 + $0x168] sm:$0xff] %v240
                %v242 = vld [vmem:[%s148 + $0x450] sm:$0xff]
                %243 = vst [vmem:[%s149 + $0x170] sm:$0xff] %v242
                %v244 = vld [vmem:[%s148 + $0x468] sm:$0xff]
                %245 = vst [vmem:[%s149 + $0x178] sm:$0xff] %v244
              $region37: #{binaural_loss.1} parent=31 // loop_footer
                %s147 = sadd.s32 1, %s143
              $region38: #{binaural_loss.1} parent=31 // loop_footer_branch
                %142 = sbr.rel target = $region34
              $region39: #{binaural_loss.1} parent=31 // loop_exit
                _
            $region32: #{binaural_loss.1} parent=23 // pred_fallthru
              _
          $region24: #{binaural_loss.1} parent=19 // pred_fallthru
            _
          %354 = vnop
        $region20: #{binaural_loss.1} parent=15 // pred_fallthru
          _
      $region16: #{binaural_loss.1} parent=5 // pred_fallthru
        _
      %p355 = scmp.le.s32.totalorder 1, %s9
      %p356 = scmp.lt.s32.totalorder %s9, 7
      %p357 = pnand %p355, %p356
      %p358 = pneg %p357
      // Predicated region
      $region55: #{binaural_loss.1} parent=5 // pred_check
        _
      $region56: #{binaural_loss.1} parent=5 // pred_check_branch
        %360 = sbr.rel (%p357) target = $region58
      $region57: #{binaural_loss.1} parent=5 // pred_region
        %s361 = ssub.s32 %s9, 1
        %s362 = sand.u32 %s36, 1
        %s363 = sand.u32 %s36, 1
        %s364 = smul.addr %s363, 384
        %s365 = scalar_lea.vmem [#allocation2], %s364
        // Predicated region
        $region59: #{binaural_loss.1} parent=57 // pred_check
          %p366 = pneg %p49
        $region60: #{binaural_loss.1} parent=57 // pred_check_branch
          %368 = sbr.rel (%p366) target = $region62
        $region61: #{binaural_loss.1} parent=57 // pred_region
          _
        $region62: #{binaural_loss.1} parent=57 // pred_fallthru
          _
        %s369 = sand.u32 %s36, 1
        %s370 = sand.u32 %s36, 1
        %s371 = smul.addr %s370, 384
        %s372 = scalar_lea.vmem [#allocation2], %s371
        %p373 = pneg %p49
        %p374 = pneg %p46
        %p375 = pneg %p77
        %p376 = pneg %p74
        %p377 = scmp.lt.s32.totalorder %s18, 1
        %s378 = scalar_select %p377, %s18, 1
        %p379 = scmp.lt.s32.totalorder %s19, 2
        %s380 = scalar_select %p379, %s19, 2
        %s381 = smul.addr %s378, 3
        %s382 = sadd.s32 %s380, %s381
        %s383 = smul.addr %s382, 8
        %s384 = scalar_lea.vmem %s1, %s383
        %p385 = pneg %p105
        %p386 = pneg %p102
        %p387 = scmp.lt.s32.totalorder %s18, 1
        %s388 = scalar_select %p387, %s18, 1
        %p389 = scmp.lt.s32.totalorder %s19, 2
        %s390 = scalar_select %p389, %s19, 2
        %s391 = smul.addr %s388, 3
        %s392 = sadd.s32 %s390, %s391
        %s393 = smul.addr %s392, 8
        %s394 = scalar_lea.vmem %s2, %s393
        %p395 = scmp.lt.s32.totalorder %s18, 1
        %s396 = scalar_select %p395, %s18, 1
        %p397 = scmp.lt.s32.totalorder %s19, 2
        %s398 = scalar_select %p397, %s19, 2
        %s399 = smul.addr %s396, 3
        %s400 = sadd.s32 %s398, %s399
        %s401 = smul.addr %s400, 8
        %s402 = scalar_lea.vmem %s1, %s401
        %p403 = scmp.lt.s32.totalorder %s18, 1
        %s404 = scalar_select %p403, %s18, 1
        %p405 = scmp.lt.s32.totalorder %s19, 2
        %s406 = scalar_select %p405, %s19, 2
        %s407 = smul.addr %s404, 3
        %s408 = sadd.s32 %s406, %s407
        %s409 = smul.addr %s408, 8
        %s410 = scalar_lea.vmem %s2, %s409
        %v411 = vld [vmem:[%s365] sm:$0xff]
        %v412 = vld [vmem:[%s365 + $0x8] sm:$0xff]
        %v413 = vld [vmem:[%s365 + $0x10] sm:$0xff]
        %v414 = vld [vmem:[%s365 + $0x18] sm:$0xff]
        %v415 = vld [vmem:[%s365 + $0x20] sm:$0xff]
        %v416 = vld [vmem:[%s365 + $0x28] sm:$0x1]
        %s417 = scalar_lea.vmem %s365, 48 [#allocation2]
        %v418 = vld [vmem:[%s417] sm:$0xff]
        %v419 = vld [vmem:[%s417 + $0x8] sm:$0xff]
        %v420 = vld [vmem:[%s417 + $0x10] sm:$0xff]
        %v421 = vld [vmem:[%s417 + $0x18] sm:$0xff]
        %v422 = vld [vmem:[%s417 + $0x20] sm:$0xff]
        %v423 = vld [vmem:[%s417 + $0x28] sm:$0x1]
        %s424 = scalar_lea.vmem %s365, 96 [#allocation2]
        %v425 = vld [vmem:[%s424] sm:$0xff]
        %v426 = vld [vmem:[%s424 + $0x8] sm:$0xff]
        %v427 = vld [vmem:[%s424 + $0x10] sm:$0xff]
        %v428 = vld [vmem:[%s424 + $0x18] sm:$0xff]
        %v429 = vld [vmem:[%s424 + $0x20] sm:$0xff]
        %v430 = vld [vmem:[%s424 + $0x28] sm:$0x1]
        %s431 = scalar_lea.vmem %s365, 144 [#allocation2]
        %v432 = vld [vmem:[%s431] sm:$0xff]
        %v433 = vld [vmem:[%s431 + $0x8] sm:$0xff]
        %v434 = vld [vmem:[%s431 + $0x10] sm:$0xff]
        %v435 = vld [vmem:[%s431 + $0x18] sm:$0xff]
        %v436 = vld [vmem:[%s431 + $0x20] sm:$0xff]
        %v437 = vld [vmem:[%s431 + $0x28] sm:$0x1]
        %s438 = scalar_lea.vmem %s365, 192 [#allocation2]
        %v439 = vld [vmem:[%s438] sm:$0xff]
        %v440 = vld [vmem:[%s438 + $0x8] sm:$0xff]
        %v441 = vld [vmem:[%s438 + $0x10] sm:$0xff]
        %v442 = vld [vmem:[%s438 + $0x18] sm:$0xff]
        %v443 = vld [vmem:[%s438 + $0x20] sm:$0xff]
        %v444 = vld [vmem:[%s438 + $0x28] sm:$0x1]
        %s445 = scalar_lea.vmem %s365, 240 [#allocation2]
        %v446 = vld [vmem:[%s445] sm:$0xff]
        %v447 = vld [vmem:[%s445 + $0x8] sm:$0xff]
        %v448 = vld [vmem:[%s445 + $0x10] sm:$0xff]
        %v449 = vld [vmem:[%s445 + $0x18] sm:$0xff]
        %v450 = vld [vmem:[%s445 + $0x20] sm:$0xff]
        %v451 = vld [vmem:[%s445 + $0x28] sm:$0x1]
        %s452 = scalar_lea.vmem %s365, 288 [#allocation2]
        %v453 = vld [vmem:[%s452] sm:$0xff]
        %v454 = vld [vmem:[%s452 + $0x8] sm:$0xff]
        %v455 = vld [vmem:[%s452 + $0x10] sm:$0xff]
        %v456 = vld [vmem:[%s452 + $0x18] sm:$0xff]
        %v457 = vld [vmem:[%s452 + $0x20] sm:$0xff]
        %v458 = vld [vmem:[%s452 + $0x28] sm:$0x1]
        %s459 = scalar_lea.vmem %s365, 336 [#allocation2]
        %v460 = vld [vmem:[%s459] sm:$0xff]
        %v461 = vld [vmem:[%s459 + $0x8] sm:$0xff]
        %v462 = vld [vmem:[%s459 + $0x10] sm:$0xff]
        %v463 = vld [vmem:[%s459 + $0x18] sm:$0xff]
        %v464 = vld [vmem:[%s459 + $0x20] sm:$0xff]
        %v465 = vld [vmem:[%s459 + $0x28] sm:$0x1]
        %v466 = vmul.f32 %v411, %v411
        %v467 = vmul.f32 %v412, %v412
        %v468 = vmul.f32 %v413, %v413
        %v469 = vmul.f32 %v414, %v414
        %v470 = vmul.f32 %v415, %v415
        %v471 = vmul.f32 %v416, %v416
        %v472 = vmul.f32 %v418, %v418
        %v473 = vmul.f32 %v419, %v419
        %v474 = vmul.f32 %v420, %v420
        %v475 = vmul.f32 %v421, %v421
        %v476 = vmul.f32 %v422, %v422
        %v477 = vmul.f32 %v423, %v423
        %v478 = vadd.f32 %v466, %v472
        %v479 = vadd.f32 %v467, %v473
        %v480 = vadd.f32 %v468, %v474
        %v481 = vadd.f32 %v469, %v475
        %v482 = vadd.f32 %v470, %v476
        %v483 = vadd.f32 %v471, %v477
        %v484 = vmul.f32 %v425, %v425
        %v485 = vmul.f32 %v426, %v426
        %v486 = vmul.f32 %v427, %v427
        %v487 = vmul.f32 %v428, %v428
        %v488 = vmul.f32 %v429, %v429
        %v489 = vmul.f32 %v430, %v430
        %v490 = vmul.f32 %v432, %v432
        %v491 = vmul.f32 %v433, %v433
        %v492 = vmul.f32 %v434, %v434
        %v493 = vmul.f32 %v435, %v435
        %v494 = vmul.f32 %v436, %v436
        %v495 = vmul.f32 %v437, %v437
        %v496 = vadd.f32 %v484, %v490
        %v497 = vadd.f32 %v485, %v491
        %v498 = vadd.f32 %v486, %v492
        %v499 = vadd.f32 %v487, %v493
        %v500 = vadd.f32 %v488, %v494
        %v501 = vadd.f32 %v489, %v495
        %v502 = vmax.f32 %v478, %v482
        %vm503 = vcmask 1040384
        %v504 = vsel %vm503, %v483, -inf
        %v505 = vmax.f32 %v479, %v504
        %v506 = vmax.f32 %v502, %v505
        %v507 = vmax.f32 %v480, %v481
        %v508 = vmax.f32 %v506, %v507
        %v509 = vrot.slane %v508, 4
        %v510 = vmax.f32 %v508, %v509
        %v511 = vrot.slane %v510, 2
        %v512 = vmax.f32 %v510, %v511
        %v513 = vrot.slane %v512, 1
        %v514 = vmax.f32 %v512, %v513
        %v515 = vmul.f32 %v514, 0.01
        %v516 = vmax.f32 %v496, %v500
        %v517 = vsel %vm503, %v501, -inf
        %v518 = vmax.f32 %v497, %v517
        %v519 = vmax.f32 %v516, %v518
        %v520 = vmax.f32 %v498, %v499
        %v521 = vmax.f32 %v519, %v520
        %v522 = vrot.slane %v521, 4
        %v523 = vmax.f32 %v521, %v522
        %v524 = vrot.slane %v523, 2
        %v525 = vmax.f32 %v523, %v524
        %v526 = vrot.slane %v525, 1
        %v527 = vmax.f32 %v525, %v526
        %v528 = vmul.f32 %v527, 0.01
        %vm529 = vcmp.gt.f32.partialorder %v478, %v515
        %vm530 = vcmp.gt.f32.partialorder %v479, %v515
        %vm531 = vcmp.gt.f32.partialorder %v480, %v515
        %vm532 = vcmp.gt.f32.partialorder %v481, %v515
        %vm533 = vcmp.gt.f32.partialorder %v482, %v515
        %vm534 = vcmp.gt.f32.partialorder %v483, %v515
        %vm535 = vcmp.gt.f32.partialorder %v496, %v528
        %vm536 = vcmp.gt.f32.partialorder %v497, %v528
        %vm537 = vcmp.gt.f32.partialorder %v498, %v528
        %vm538 = vcmp.gt.f32.partialorder %v499, %v528
        %vm539 = vcmp.gt.f32.partialorder %v500, %v528
        %vm540 = vcmp.gt.f32.partialorder %v501, %v528
        %vm541 = vmand %vm529, %vm535
        %vm542 = vmand %vm530, %vm536
        %vm543 = vmand %vm531, %vm537
        %vm544 = vmand %vm532, %vm538
        %vm545 = vmand %vm533, %vm539
        %vm546 = vmand %vm534, %vm540
        %v547 = vsel %vm541, 1.0, 0.0
        %v548 = vsel %vm542, 1.0, 0.0
        %v549 = vsel %vm543, 1.0, 0.0
        %v550 = vsel %vm544, 1.0, 0.0
        %v551 = vsel %vm545, 1.0, 0.0
        %v552 = vsel %vm546, 1.0, 0.0
        %v553 = vadd.f32 %v411, 1e-06
        %v554 = vadd.f32 %v412, 1e-06
        %v555 = vadd.f32 %v413, 1e-06
        %v556 = vadd.f32 %v414, 1e-06
        %v557 = vadd.f32 %v415, 1e-06
        %v558 = vadd.f32 %v416, 1e-06
        %v559 = vadd.f32 %v425, 1e-06
        %v560 = vadd.f32 %v426, 1e-06
        %v561 = vadd.f32 %v427, 1e-06
        %v562 = vadd.f32 %v428, 1e-06
        %v563 = vadd.f32 %v429, 1e-06
        %v564 = vadd.f32 %v430, 1e-06
        %v565 = vmul.f32 %v553, %v559
        %v566 = vmul.f32 %v554, %v560
        %v567 = vmul.f32 %v555, %v561
        %v568 = vmul.f32 %v556, %v562
        %v569 = vmul.f32 %v557, %v563
        %v570 = vmul.f32 %v558, %v564
        %v571 = vmul.f32 %v418, %v432
        %v572 = vmul.f32 %v419, %v433
        %v573 = vmul.f32 %v420, %v434
        %v574 = vmul.f32 %v421, %v435
        %v575 = vmul.f32 %v422, %v436
        %v576 = vmul.f32 %v423, %v437
        %v577 = vadd.f32 %v565, %v571
        %v578 = vadd.f32 %v566, %v572
        %v579 = vadd.f32 %v567, %v573
        %v580 = vadd.f32 %v568, %v574
        %v581 = vadd.f32 %v569, %v575
        %v582 = vadd.f32 %v570, %v576
        %v583 = vmul.f32 %v418, %v559
        %v584 = vmul.f32 %v419, %v560
        %v585 = vmul.f32 %v420, %v561
        %v586 = vmul.f32 %v421, %v562
        %v587 = vmul.f32 %v422, %v563
        %v588 = vmul.f32 %v423, %v564
        %v589 = vmul.f32 %v553, %v432
        %v590 = vmul.f32 %v554, %v433
        %v591 = vmul.f32 %v555, %v434
        %v592 = vmul.f32 %v556, %v435
        %v593 = vmul.f32 %v557, %v436
        %v594 = vmul.f32 %v558, %v437
        %v595 = vsub.f32 %v583, %v589
        %v596 = vsub.f32 %v584, %v590
        %v597 = vsub.f32 %v585, %v591
        %v598 = vsub.f32 %v586, %v592
        %v599 = vsub.f32 %v587, %v593
        %v600 = vsub.f32 %v588, %v594
        %v601 = vand.u32 2147483647, %v577
        %v602 = vand.u32 2147483647, %v578
        %v603 = vand.u32 2147483647, %v579
        %v604 = vand.u32 2147483647, %v580
        %v605 = vand.u32 2147483647, %v581
        %v606 = vand.u32 2147483647, %v582
        %v607 = vand.u32 2147483647, %v595
        %v608 = vand.u32 2147483647, %v596
        %v609 = vand.u32 2147483647, %v597
        %v610 = vand.u32 2147483647, %v598
        %v611 = vand.u32 2147483647, %v599
        %v612 = vand.u32 2147483647, %v600
        %v613 = vmax.f32 %v601, %v607
        %v614 = vmax.f32 %v602, %v608
        %v615 = vmax.f32 %v603, %v609
        %v616 = vmax.f32 %v604, %v610
        %v617 = vmax.f32 %v605, %v611
        %v618 = vmax.f32 %v606, %v612
        %v619 = vmax.f32 %v613, 1e-30
        %v620 = vmax.f32 %v614, 1e-30
        %v621 = vmax.f32 %v615, 1e-30
        %v622 = vmax.f32 %v616, 1e-30
        %v623 = vmax.f32 %v617, 1e-30
        %v624 = vmax.f32 %v618, 1e-30
        %v625 = vmin.f32 %v601, %v607
        %v626 = vmin.f32 %v602, %v608
        %v627 = vmin.f32 %v603, %v609
        %v628 = vmin.f32 %v604, %v610
        %v629 = vmin.f32 %v605, %v611
        %v630 = vmin.f32 %v606, %v612
        %v631 = vrcp.pop %v619
        %v632 = vrcp.pop %v620
        %v633 = vrcp.pop %v621
        %v634 = vrcp.pop %v622
        %v635 = vrcp.pop %v623
        %v636 = vrcp.pop %v624
        %v637 = vmul.f32 %v619, %v631
        %v638 = vmul.f32 %v620, %v632
        %v639 = vmul.f32 %v621, %v633
        %v640 = vmul.f32 %v622, %v634
        %v641 = vmul.f32 %v623, %v635
        %v642 = vmul.f32 %v624, %v636
        %v643 = vsub.f32 2.0, %v637
        %v644 = vsub.f32 2.0, %v638
        %v645 = vsub.f32 2.0, %v639
        %v646 = vsub.f32 2.0, %v640
        %v647 = vsub.f32 2.0, %v641
        %v648 = vsub.f32 2.0, %v642
        %v649 = vmul.f32 %v631, %v643
        %v650 = vmul.f32 %v632, %v644
        %v651 = vmul.f32 %v633, %v645
        %v652 = vmul.f32 %v634, %v646
        %v653 = vmul.f32 %v635, %v647
        %v654 = vmul.f32 %v636, %v648
        %v655 = vmul.f32 %v625, %v649
        %v656 = vmul.f32 %v626, %v650
        %v657 = vmul.f32 %v627, %v651
        %v658 = vmul.f32 %v628, %v652
        %v659 = vmul.f32 %v629, %v653
        %v660 = vmul.f32 %v630, %v654
        %vm661 = vcmp.gt.f32.partialorder %v655, 0.41421357
        %vm662 = vcmp.gt.f32.partialorder %v656, 0.41421357
        %vm663 = vcmp.gt.f32.partialorder %v657, 0.41421357
        %vm664 = vcmp.gt.f32.partialorder %v658, 0.41421357
        %vm665 = vcmp.gt.f32.partialorder %v659, 0.41421357
        %vm666 = vcmp.gt.f32.partialorder %v660, 0.41421357
        %v667 = vsub.f32 %v655, 1.0
        %v668 = vsub.f32 %v656, 1.0
        %v669 = vsub.f32 %v657, 1.0
        %v670 = vsub.f32 %v658, 1.0
        %v671 = vsub.f32 %v659, 1.0
        %v672 = vsub.f32 %v660, 1.0
        %v673 = vadd.f32 %v655, 1.0
        %v674 = vadd.f32 %v656, 1.0
        %v675 = vadd.f32 %v657, 1.0
        %v676 = vadd.f32 %v658, 1.0
        %v677 = vadd.f32 %v659, 1.0
        %v678 = vadd.f32 %v660, 1.0
        %v679 = vrcp.pop %v673
        %v680 = vrcp.pop %v674
        %v681 = vrcp.pop %v675
        %v682 = vrcp.pop %v676
        %v683 = vrcp.pop %v677
        %v684 = vrcp.pop %v678
        %v685 = vmul.f32 %v673, %v679
        %v686 = vmul.f32 %v674, %v680
        %v687 = vmul.f32 %v675, %v681
        %v688 = vmul.f32 %v676, %v682
        %v689 = vmul.f32 %v677, %v683
        %v690 = vmul.f32 %v678, %v684
        %v691 = vsub.f32 2.0, %v685
        %v692 = vsub.f32 2.0, %v686
        %v693 = vsub.f32 2.0, %v687
        %v694 = vsub.f32 2.0, %v688
        %v695 = vsub.f32 2.0, %v689
        %v696 = vsub.f32 2.0, %v690
        %v697 = vmul.f32 %v679, %v691
        %v698 = vmul.f32 %v680, %v692
        %v699 = vmul.f32 %v681, %v693
        %v700 = vmul.f32 %v682, %v694
        %v701 = vmul.f32 %v683, %v695
        %v702 = vmul.f32 %v684, %v696
        %v703 = vmul.f32 %v667, %v697
        %v704 = vmul.f32 %v668, %v698
        %v705 = vmul.f32 %v669, %v699
        %v706 = vmul.f32 %v670, %v700
        %v707 = vmul.f32 %v671, %v701
        %v708 = vmul.f32 %v672, %v702
        %v709 = vsel %vm661, %v703, %v655
        %v710 = vsel %vm662, %v704, %v656
        %v711 = vsel %vm663, %v705, %v657
        %v712 = vsel %vm664, %v706, %v658
        %v713 = vsel %vm665, %v707, %v659
        %v714 = vsel %vm666, %v708, %v660
        %v715 = vsel %vm661, 0.7853982, 0.0
        %v716 = vsel %vm662, 0.7853982, 0.0
        %v717 = vsel %vm663, 0.7853982, 0.0
        %v718 = vsel %vm664, 0.7853982, 0.0
        %v719 = vsel %vm665, 0.7853982, 0.0
        %v720 = vsel %vm666, 0.7853982, 0.0
        %v721 = vmul.f32 %v709, %v709
        %v722 = vmul.f32 %v710, %v710
        %v723 = vmul.f32 %v711, %v711
        %v724 = vmul.f32 %v712, %v712
        %v725 = vmul.f32 %v713, %v713
        %v726 = vmul.f32 %v714, %v714
        %v727 = vmul.f32 %v721, 0.080537446
        %v728 = vmul.f32 %v722, 0.080537446
        %v729 = vmul.f32 %v723, 0.080537446
        %v730 = vmul.f32 %v724, 0.080537446
        %v731 = vmul.f32 %v725, 0.080537446
        %v732 = vmul.f32 %v726, 0.080537446
        %v733 = vsub.f32 %v727, 0.13877685
        %v734 = vsub.f32 %v728, 0.13877685
        %v735 = vsub.f32 %v729, 0.13877685
        %v736 = vsub.f32 %v730, 0.13877685
        %v737 = vsub.f32 %v731, 0.13877685
        %v738 = vsub.f32 %v732, 0.13877685
        %v739 = vmul.f32 %v733, %v721
        %v740 = vmul.f32 %v734, %v722
        %v741 = vmul.f32 %v735, %v723
        %v742 = vmul.f32 %v736, %v724
        %v743 = vmul.f32 %v737, %v725
        %v744 = vmul.f32 %v738, %v726
        %v745 = vadd.f32 %v739, 0.19977711
        %v746 = vadd.f32 %v740, 0.19977711
        %v747 = vadd.f32 %v741, 0.19977711
        %v748 = vadd.f32 %v742, 0.19977711
        %v749 = vadd.f32 %v743, 0.19977711
        %v750 = vadd.f32 %v744, 0.19977711
        %v751 = vmul.f32 %v745, %v721
        %v752 = vmul.f32 %v746, %v722
        %v753 = vmul.f32 %v747, %v723
        %v754 = vmul.f32 %v748, %v724
        %v755 = vmul.f32 %v749, %v725
        %v756 = vmul.f32 %v750, %v726
        %v757 = vsub.f32 %v751, 0.3333295
        %v758 = vsub.f32 %v752, 0.3333295
        %v759 = vsub.f32 %v753, 0.3333295
        %v760 = vsub.f32 %v754, 0.3333295
        %v761 = vsub.f32 %v755, 0.3333295
        %v762 = vsub.f32 %v756, 0.3333295
        %v763 = vmul.f32 %v757, %v721
        %v764 = vmul.f32 %v758, %v722
        %v765 = vmul.f32 %v759, %v723
        %v766 = vmul.f32 %v760, %v724
        %v767 = vmul.f32 %v761, %v725
        %v768 = vmul.f32 %v762, %v726
        %v769 = vmul.f32 %v763, %v709
        %v770 = vmul.f32 %v764, %v710
        %v771 = vmul.f32 %v765, %v711
        %v772 = vmul.f32 %v766, %v712
        %v773 = vmul.f32 %v767, %v713
        %v774 = vmul.f32 %v768, %v714
        %v775 = vadd.f32 %v715, %v769
        %v776 = vadd.f32 %v716, %v770
        %v777 = vadd.f32 %v717, %v771
        %v778 = vadd.f32 %v718, %v772
        %v779 = vadd.f32 %v719, %v773
        %v780 = vadd.f32 %v720, %v774
        %v781 = vadd.f32 %v775, %v709
        %v782 = vadd.f32 %v776, %v710
        %v783 = vadd.f32 %v777, %v711
        %v784 = vadd.f32 %v778, %v712
        %v785 = vadd.f32 %v779, %v713
        %v786 = vadd.f32 %v780, %v714
        %vm787 = vcmp.gt.f32.partialorder %v607, %v601
        %vm788 = vcmp.gt.f32.partialorder %v608, %v602
        %vm789 = vcmp.gt.f32.partialorder %v609, %v603
        %vm790 = vcmp.gt.f32.partialorder %v610, %v604
        %vm791 = vcmp.gt.f32.partialorder %v611, %v605
        %vm792 = vcmp.gt.f32.partialorder %v612, %v606
        %v793 = vsub.f32 1.5707964, %v781
        %v794 = vsub.f32 1.5707964, %v782
        %v795 = vsub.f32 1.5707964, %v783
        %v796 = vsub.f32 1.5707964, %v784
        %v797 = vsub.f32 1.5707964, %v785
        %v798 = vsub.f32 1.5707964, %v786
        %v799 = vsel %vm787, %v793, %v781
        %v800 = vsel %vm788, %v794, %v782
        %v801 = vsel %vm789, %v795, %v783
        %v802 = vsel %vm790, %v796, %v784
        %v803 = vsel %vm791, %v797, %v785
        %v804 = vsel %vm792, %v798, %v786
        %vm805 = vcmp.lt.f32.partialorder %v577, 0.0
        %vm806 = vcmp.lt.f32.partialorder %v578, 0.0
        %vm807 = vcmp.lt.f32.partialorder %v579, 0.0
        %vm808 = vcmp.lt.f32.partialorder %v580, 0.0
        %vm809 = vcmp.lt.f32.partialorder %v581, 0.0
        %vm810 = vcmp.lt.f32.partialorder %v582, 0.0
        %v811 = vsub.f32 3.1415927, %v799
        %v812 = vsub.f32 3.1415927, %v800
        %v813 = vsub.f32 3.1415927, %v801
        %v814 = vsub.f32 3.1415927, %v802
        %v815 = vsub.f32 3.1415927, %v803
        %v816 = vsub.f32 3.1415927, %v804
        %v817 = vsel %vm805, %v811, %v799
        %v818 = vsel %vm806, %v812, %v800
        %v819 = vsel %vm807, %v813, %v801
        %v820 = vsel %vm808, %v814, %v802
        %v821 = vsel %vm809, %v815, %v803
        %v822 = vsel %vm810, %v816, %v804
        %vm823 = vcmp.lt.f32.partialorder %v595, 0.0
        %vm824 = vcmp.lt.f32.partialorder %v596, 0.0
        %vm825 = vcmp.lt.f32.partialorder %v597, 0.0
        %vm826 = vcmp.lt.f32.partialorder %v598, 0.0
        %vm827 = vcmp.lt.f32.partialorder %v599, 0.0
        %vm828 = vcmp.lt.f32.partialorder %v600, 0.0
        %v829 = vsub.f32 0.0, %v817
        %v830 = vsub.f32 0.0, %v818
        %v831 = vsub.f32 0.0, %v819
        %v832 = vsub.f32 0.0, %v820
        %v833 = vsub.f32 0.0, %v821
        %v834 = vsub.f32 0.0, %v822
        %v835 = vsel %vm823, %v829, %v817
        %v836 = vsel %vm824, %v830, %v818
        %v837 = vsel %vm825, %v831, %v819
        %v838 = vsel %vm826, %v832, %v820
        %v839 = vsel %vm827, %v833, %v821
        %v840 = vsel %vm828, %v834, %v822
        %v841 = vadd.f32 %v439, 1e-06
        %v842 = vadd.f32 %v440, 1e-06
        %v843 = vadd.f32 %v441, 1e-06
        %v844 = vadd.f32 %v442, 1e-06
        %v845 = vadd.f32 %v443, 1e-06
        %v846 = vadd.f32 %v444, 1e-06
        %v847 = vadd.f32 %v453, 1e-06
        %v848 = vadd.f32 %v454, 1e-06
        %v849 = vadd.f32 %v455, 1e-06
        %v850 = vadd.f32 %v456, 1e-06
        %v851 = vadd.f32 %v457, 1e-06
        %v852 = vadd.f32 %v458, 1e-06
        %v853 = vmul.f32 %v841, %v847
        %v854 = vmul.f32 %v842, %v848
        %v855 = vmul.f32 %v843, %v849
        %v856 = vmul.f32 %v844, %v850
        %v857 = vmul.f32 %v845, %v851
        %v858 = vmul.f32 %v846, %v852
        %v859 = vmul.f32 %v446, %v460
        %v860 = vmul.f32 %v447, %v461
        %v861 = vmul.f32 %v448, %v462
        %v862 = vmul.f32 %v449, %v463
        %v863 = vmul.f32 %v450, %v464
        %v864 = vmul.f32 %v451, %v465
        %v865 = vadd.f32 %v853, %v859
        %v866 = vadd.f32 %v854, %v860
        %v867 = vadd.f32 %v855, %v861
        %v868 = vadd.f32 %v856, %v862
        %v869 = vadd.f32 %v857, %v863
        %v870 = vadd.f32 %v858, %v864
        %v871 = vmul.f32 %v446, %v847
        %v872 = vmul.f32 %v447, %v848
        %v873 = vmul.f32 %v448, %v849
        %v874 = vmul.f32 %v449, %v850
        %v875 = vmul.f32 %v450, %v851
        %v876 = vmul.f32 %v451, %v852
        %v877 = vmul.f32 %v841, %v460
        %v878 = vmul.f32 %v842, %v461
        %v879 = vmul.f32 %v843, %v462
        %v880 = vmul.f32 %v844, %v463
        %v881 = vmul.f32 %v845, %v464
        %v882 = vmul.f32 %v846, %v465
        %v883 = vsub.f32 %v871, %v877
        %v884 = vsub.f32 %v872, %v878
        %v885 = vsub.f32 %v873, %v879
        %v886 = vsub.f32 %v874, %v880
        %v887 = vsub.f32 %v875, %v881
        %v888 = vsub.f32 %v876, %v882
        %v889 = vand.u32 2147483647, %v865
        %v890 = vand.u32 2147483647, %v866
        %v891 = vand.u32 2147483647, %v867
        %v892 = vand.u32 2147483647, %v868
        %v893 = vand.u32 2147483647, %v869
        %v894 = vand.u32 2147483647, %v870
        %v895 = vand.u32 2147483647, %v883
        %v896 = vand.u32 2147483647, %v884
        %v897 = vand.u32 2147483647, %v885
        %v898 = vand.u32 2147483647, %v886
        %v899 = vand.u32 2147483647, %v887
        %v900 = vand.u32 2147483647, %v888
        %v901 = vmax.f32 %v889, %v895
        %v902 = vmax.f32 %v890, %v896
        %v903 = vmax.f32 %v891, %v897
        %v904 = vmax.f32 %v892, %v898
        %v905 = vmax.f32 %v893, %v899
        %v906 = vmax.f32 %v894, %v900
        %v907 = vmax.f32 %v901, 1e-30
        %v908 = vmax.f32 %v902, 1e-30
        %v909 = vmax.f32 %v903, 1e-30
        %v910 = vmax.f32 %v904, 1e-30
        %v911 = vmax.f32 %v905, 1e-30
        %v912 = vmax.f32 %v906, 1e-30
        %v913 = vmin.f32 %v889, %v895
        %v914 = vmin.f32 %v890, %v896
        %v915 = vmin.f32 %v891, %v897
        %v916 = vmin.f32 %v892, %v898
        %v917 = vmin.f32 %v893, %v899
        %v918 = vmin.f32 %v894, %v900
        %v919 = vrcp.pop %v907
        %v920 = vrcp.pop %v908
        %v921 = vrcp.pop %v909
        %v922 = vrcp.pop %v910
        %v923 = vrcp.pop %v911
        %v924 = vrcp.pop %v912
        %v925 = vmul.f32 %v907, %v919
        %v926 = vmul.f32 %v908, %v920
        %v927 = vmul.f32 %v909, %v921
        %v928 = vmul.f32 %v910, %v922
        %v929 = vmul.f32 %v911, %v923
        %v930 = vmul.f32 %v912, %v924
        %v931 = vsub.f32 2.0, %v925
        %v932 = vsub.f32 2.0, %v926
        %v933 = vsub.f32 2.0, %v927
        %v934 = vsub.f32 2.0, %v928
        %v935 = vsub.f32 2.0, %v929
        %v936 = vsub.f32 2.0, %v930
        %v937 = vmul.f32 %v919, %v931
        %v938 = vmul.f32 %v920, %v932
        %v939 = vmul.f32 %v921, %v933
        %v940 = vmul.f32 %v922, %v934
        %v941 = vmul.f32 %v923, %v935
        %v942 = vmul.f32 %v924, %v936
        %v943 = vmul.f32 %v913, %v937
        %v944 = vmul.f32 %v914, %v938
        %v945 = vmul.f32 %v915, %v939
        %v946 = vmul.f32 %v916, %v940
        %v947 = vmul.f32 %v917, %v941
        %v948 = vmul.f32 %v918, %v942
        %vm949 = vcmp.gt.f32.partialorder %v943, 0.41421357
        %vm950 = vcmp.gt.f32.partialorder %v944, 0.41421357
        %vm951 = vcmp.gt.f32.partialorder %v945, 0.41421357
        %vm952 = vcmp.gt.f32.partialorder %v946, 0.41421357
        %vm953 = vcmp.gt.f32.partialorder %v947, 0.41421357
        %vm954 = vcmp.gt.f32.partialorder %v948, 0.41421357
        %v955 = vsub.f32 %v943, 1.0
        %v956 = vsub.f32 %v944, 1.0
        %v957 = vsub.f32 %v945, 1.0
        %v958 = vsub.f32 %v946, 1.0
        %v959 = vsub.f32 %v947, 1.0
        %v960 = vsub.f32 %v948, 1.0
        %v961 = vadd.f32 %v943, 1.0
        %v962 = vadd.f32 %v944, 1.0
        %v963 = vadd.f32 %v945, 1.0
        %v964 = vadd.f32 %v946, 1.0
        %v965 = vadd.f32 %v947, 1.0
        %v966 = vadd.f32 %v948, 1.0
        %v967 = vrcp.pop %v961
        %v968 = vrcp.pop %v962
        %v969 = vrcp.pop %v963
        %v970 = vrcp.pop %v964
        %v971 = vrcp.pop %v965
        %v972 = vrcp.pop %v966
        %v973 = vmul.f32 %v961, %v967
        %v974 = vmul.f32 %v962, %v968
        %v975 = vmul.f32 %v963, %v969
        %v976 = vmul.f32 %v964, %v970
        %v977 = vmul.f32 %v965, %v971
        %v978 = vmul.f32 %v966, %v972
        %v979 = vsub.f32 2.0, %v973
        %v980 = vsub.f32 2.0, %v974
        %v981 = vsub.f32 2.0, %v975
        %v982 = vsub.f32 2.0, %v976
        %v983 = vsub.f32 2.0, %v977
        %v984 = vsub.f32 2.0, %v978
        %v985 = vmul.f32 %v967, %v979
        %v986 = vmul.f32 %v968, %v980
        %v987 = vmul.f32 %v969, %v981
        %v988 = vmul.f32 %v970, %v982
        %v989 = vmul.f32 %v971, %v983
        %v990 = vmul.f32 %v972, %v984
        %v991 = vmul.f32 %v955, %v985
        %v992 = vmul.f32 %v956, %v986
        %v993 = vmul.f32 %v957, %v987
        %v994 = vmul.f32 %v958, %v988
        %v995 = vmul.f32 %v959, %v989
        %v996 = vmul.f32 %v960, %v990
        %v997 = vsel %vm949, %v991, %v943
        %v998 = vsel %vm950, %v992, %v944
        %v999 = vsel %vm951, %v993, %v945
        %v1000 = vsel %vm952, %v994, %v946
        %v1001 = vsel %vm953, %v995, %v947
        %v1002 = vsel %vm954, %v996, %v948
        %v1003 = vsel %vm949, 0.7853982, 0.0
        %v1004 = vsel %vm950, 0.7853982, 0.0
        %v1005 = vsel %vm951, 0.7853982, 0.0
        %v1006 = vsel %vm952, 0.7853982, 0.0
        %v1007 = vsel %vm953, 0.7853982, 0.0
        %v1008 = vsel %vm954, 0.7853982, 0.0
        %v1009 = vmul.f32 %v997, %v997
        %v1010 = vmul.f32 %v998, %v998
        %v1011 = vmul.f32 %v999, %v999
        %v1012 = vmul.f32 %v1000, %v1000
        %v1013 = vmul.f32 %v1001, %v1001
        %v1014 = vmul.f32 %v1002, %v1002
        %v1015 = vmul.f32 %v1009, 0.080537446
        %v1016 = vmul.f32 %v1010, 0.080537446
        %v1017 = vmul.f32 %v1011, 0.080537446
        %v1018 = vmul.f32 %v1012, 0.080537446
        %v1019 = vmul.f32 %v1013, 0.080537446
        %v1020 = vmul.f32 %v1014, 0.080537446
        %v1021 = vsub.f32 %v1015, 0.13877685
        %v1022 = vsub.f32 %v1016, 0.13877685
        %v1023 = vsub.f32 %v1017, 0.13877685
        %v1024 = vsub.f32 %v1018, 0.13877685
        %v1025 = vsub.f32 %v1019, 0.13877685
        %v1026 = vsub.f32 %v1020, 0.13877685
        %v1027 = vmul.f32 %v1021, %v1009
        %v1028 = vmul.f32 %v1022, %v1010
        %v1029 = vmul.f32 %v1023, %v1011
        %v1030 = vmul.f32 %v1024, %v1012
        %v1031 = vmul.f32 %v1025, %v1013
        %v1032 = vmul.f32 %v1026, %v1014
        %v1033 = vadd.f32 %v1027, 0.19977711
        %v1034 = vadd.f32 %v1028, 0.19977711
        %v1035 = vadd.f32 %v1029, 0.19977711
        %v1036 = vadd.f32 %v1030, 0.19977711
        %v1037 = vadd.f32 %v1031, 0.19977711
        %v1038 = vadd.f32 %v1032, 0.19977711
        %v1039 = vmul.f32 %v1033, %v1009
        %v1040 = vmul.f32 %v1034, %v1010
        %v1041 = vmul.f32 %v1035, %v1011
        %v1042 = vmul.f32 %v1036, %v1012
        %v1043 = vmul.f32 %v1037, %v1013
        %v1044 = vmul.f32 %v1038, %v1014
        %v1045 = vsub.f32 %v1039, 0.3333295
        %v1046 = vsub.f32 %v1040, 0.3333295
        %v1047 = vsub.f32 %v1041, 0.3333295
        %v1048 = vsub.f32 %v1042, 0.3333295
        %v1049 = vsub.f32 %v1043, 0.3333295
        %v1050 = vsub.f32 %v1044, 0.3333295
        %v1051 = vmul.f32 %v1045, %v1009
        %v1052 = vmul.f32 %v1046, %v1010
        %v1053 = vmul.f32 %v1047, %v1011
        %v1054 = vmul.f32 %v1048, %v1012
        %v1055 = vmul.f32 %v1049, %v1013
        %v1056 = vmul.f32 %v1050, %v1014
        %v1057 = vmul.f32 %v1051, %v997
        %v1058 = vmul.f32 %v1052, %v998
        %v1059 = vmul.f32 %v1053, %v999
        %v1060 = vmul.f32 %v1054, %v1000
        %v1061 = vmul.f32 %v1055, %v1001
        %v1062 = vmul.f32 %v1056, %v1002
        %v1063 = vadd.f32 %v1003, %v1057
        %v1064 = vadd.f32 %v1004, %v1058
        %v1065 = vadd.f32 %v1005, %v1059
        %v1066 = vadd.f32 %v1006, %v1060
        %v1067 = vadd.f32 %v1007, %v1061
        %v1068 = vadd.f32 %v1008, %v1062
        %v1069 = vadd.f32 %v1063, %v997
        %v1070 = vadd.f32 %v1064, %v998
        %v1071 = vadd.f32 %v1065, %v999
        %v1072 = vadd.f32 %v1066, %v1000
        %v1073 = vadd.f32 %v1067, %v1001
        %v1074 = vadd.f32 %v1068, %v1002
        %vm1075 = vcmp.gt.f32.partialorder %v895, %v889
        %vm1076 = vcmp.gt.f32.partialorder %v896, %v890
        %vm1077 = vcmp.gt.f32.partialorder %v897, %v891
        %vm1078 = vcmp.gt.f32.partialorder %v898, %v892
        %vm1079 = vcmp.gt.f32.partialorder %v899, %v893
        %vm1080 = vcmp.gt.f32.partialorder %v900, %v894
        %v1081 = vsub.f32 1.5707964, %v1069
        %v1082 = vsub.f32 1.5707964, %v1070
        %v1083 = vsub.f32 1.5707964, %v1071
        %v1084 = vsub.f32 1.5707964, %v1072
        %v1085 = vsub.f32 1.5707964, %v1073
        %v1086 = vsub.f32 1.5707964, %v1074
        %v1087 = vsel %vm1075, %v1081, %v1069
        %v1088 = vsel %vm1076, %v1082, %v1070
        %v1089 = vsel %vm1077, %v1083, %v1071
        %v1090 = vsel %vm1078, %v1084, %v1072
        %v1091 = vsel %vm1079, %v1085, %v1073
        %v1092 = vsel %vm1080, %v1086, %v1074
        %vm1093 = vcmp.lt.f32.partialorder %v865, 0.0
        %vm1094 = vcmp.lt.f32.partialorder %v866, 0.0
        %vm1095 = vcmp.lt.f32.partialorder %v867, 0.0
        %vm1096 = vcmp.lt.f32.partialorder %v868, 0.0
        %vm1097 = vcmp.lt.f32.partialorder %v869, 0.0
        %vm1098 = vcmp.lt.f32.partialorder %v870, 0.0
        %v1099 = vsub.f32 3.1415927, %v1087
        %v1100 = vsub.f32 3.1415927, %v1088
        %v1101 = vsub.f32 3.1415927, %v1089
        %v1102 = vsub.f32 3.1415927, %v1090
        %v1103 = vsub.f32 3.1415927, %v1091
        %v1104 = vsub.f32 3.1415927, %v1092
        %v1105 = vsel %vm1093, %v1099, %v1087
        %v1106 = vsel %vm1094, %v1100, %v1088
        %v1107 = vsel %vm1095, %v1101, %v1089
        %v1108 = vsel %vm1096, %v1102, %v1090
        %v1109 = vsel %vm1097, %v1103, %v1091
        %v1110 = vsel %vm1098, %v1104, %v1092
        %vm1111 = vcmp.lt.f32.partialorder %v883, 0.0
        %vm1112 = vcmp.lt.f32.partialorder %v884, 0.0
        %vm1113 = vcmp.lt.f32.partialorder %v885, 0.0
        %vm1114 = vcmp.lt.f32.partialorder %v886, 0.0
        %vm1115 = vcmp.lt.f32.partialorder %v887, 0.0
        %vm1116 = vcmp.lt.f32.partialorder %v888, 0.0
        %v1117 = vsub.f32 0.0, %v1105
        %v1118 = vsub.f32 0.0, %v1106
        %v1119 = vsub.f32 0.0, %v1107
        %v1120 = vsub.f32 0.0, %v1108
        %v1121 = vsub.f32 0.0, %v1109
        %v1122 = vsub.f32 0.0, %v1110
        %v1123 = vsel %vm1111, %v1117, %v1105
        %v1124 = vsel %vm1112, %v1118, %v1106
        %v1125 = vsel %vm1113, %v1119, %v1107
        %v1126 = vsel %vm1114, %v1120, %v1108
        %v1127 = vsel %vm1115, %v1121, %v1109
        %v1128 = vsel %vm1116, %v1122, %v1110
        %v1129 = vsub.f32 %v835, %v1123
        %v1130 = vsub.f32 %v836, %v1124
        %v1131 = vsub.f32 %v837, %v1125
        %v1132 = vsub.f32 %v838, %v1126
        %v1133 = vsub.f32 %v839, %v1127
        %v1134 = vsub.f32 %v840, %v1128
        %v1135 = vand.u32 2147483647, %v1129
        %v1136 = vand.u32 2147483647, %v1130
        %v1137 = vand.u32 2147483647, %v1131
        %v1138 = vand.u32 2147483647, %v1132
        %v1139 = vand.u32 2147483647, %v1133
        %v1140 = vand.u32 2147483647, %v1134
        %v1141 = vmul.f32 %v1135, %v547
        %v1142 = vmul.f32 %v1136, %v548
        %v1143 = vmul.f32 %v1137, %v549
        %v1144 = vmul.f32 %v1138, %v550
        %v1145 = vmul.f32 %v1139, %v551
        %v1146 = vmul.f32 %v1140, %v552
        %v1147 = vadd.f32 %v1141, %v1142
        %v1148 = vadd.f32 %v1147, %v1143
        %v1149 = vadd.f32 %v1148, %v1144
        %v1150 = vadd.f32 %v1149, %v1145
        %v1151 = vsel %vm503, %v1146, 0.0
        %v1152 = vadd.f32 %v1150, %v1151
        %1153 = vadd.xlane.f32.xlu0 %v1152
        %v1154 = vpop.xlane.xlu0 %1153
        %v1155 = vrot.slane %v1154, 4
        %v1156 = vadd.f32 %v1154, %v1155
        %v1157 = vrot.slane %v1156, 2
        %v1158 = vadd.f32 %v1156, %v1157
        %v1159 = vrot.slane %v1158, 1
        %v1160 = vadd.f32 %v1158, %v1159
        %s1161 = vtos %v1160
        %v1162 = vadd.f32 %v547, %v548
        %v1163 = vadd.f32 %v1162, %v549
        %v1164 = vadd.f32 %v1163, %v550
        %v1165 = vadd.f32 %v1164, %v551
        %v1166 = vsel %vm503, %v552, 0.0
        %v1167 = vadd.f32 %v1165, %v1166
        %1168 = vadd.xlane.f32.xlu0 %v1167
        %v1169 = vpop.xlane.xlu0 %1168
        %v1170 = vrot.slane %v1169, 4
        %v1171 = vadd.f32 %v1169, %v1170
        %v1172 = vrot.slane %v1171, 2
        %v1173 = vadd.f32 %v1171, %v1172
        %v1174 = vrot.slane %v1173, 1
        %v1175 = vadd.f32 %v1173, %v1174
        %s1176 = vtos %v1175
        %v1177 = vstv %s1161
        %v1178 = vadd.f32 %v1177, 0.0
        %1179 = vst [vmem:[%s402] sm:$0xff] %v1178
        %v1180 = vstv %s1176
        %v1181 = vadd.f32 %v1180, 0.0
        %1182 = vst [vmem:[%s410] sm:$0xff] %v1181
        %p1183 = scmp.lt.s32.totalorder %s18, 1
        %s1184 = scalar_select %p1183, %s18, 1
        %p1185 = scmp.lt.s32.totalorder %s19, 2
        %s1186 = scalar_select %p1185, %s19, 2
        %s1187 = smul.addr %s1184, 3
        %s1188 = sadd.s32 %s1186, %s1187
        %s1189 = smul.addr %s1188, 8
        %s1190 = scalar_lea.vmem %s1, %s1189
        %p1191 = scmp.lt.s32.totalorder %s18, 1
        %s1192 = scalar_select %p1191, %s18, 1
        %p1193 = scmp.lt.s32.totalorder %s19, 2
        %s1194 = scalar_select %p1193, %s19, 2
        %s1195 = smul.addr %s1192, 3
        %s1196 = sadd.s32 %s1194, %s1195
        %s1197 = smul.addr %s1196, 8
        %s1198 = scalar_lea.vmem %s2, %s1197
        // Predicated region
        $region63: #{binaural_loss.1} parent=57 // pred_check
          %p1199 = pneg %p74
        $region64: #{binaural_loss.1} parent=57 // pred_check_branch
          %1201 = sbr.rel (%p1199) target = $region66
        $region65: #{binaural_loss.1} parent=57 // pred_region
          _
        $region66: #{binaural_loss.1} parent=57 // pred_fallthru
          _
        // Predicated region
        $region67: #{binaural_loss.1} parent=57 // pred_check
          %p1202 = pneg %p102
        $region68: #{binaural_loss.1} parent=57 // pred_check_branch
          %1204 = sbr.rel (%p1202) target = $region70
        $region69: #{binaural_loss.1} parent=57 // pred_region
          _
        $region70: #{binaural_loss.1} parent=57 // pred_fallthru
          _
      $region58: #{binaural_loss.1} parent=5 // pred_fallthru
        _
      %p1205 = scmp.le.s32.totalorder 2, %s9
      // Predicated region
      $region71: #{binaural_loss.1} parent=5 // pred_check
        %p1206 = pneg %p1205
      $region72: #{binaural_loss.1} parent=5 // pred_check_branch
        %1208 = sbr.rel (%p1206) target = $region74
      $region73: #{binaural_loss.1} parent=5 // pred_region
        %s1209 = ssub.s32 %s9, 2
        // Predicated region
        $region75: #{binaural_loss.1} parent=73 // pred_check
          %p1210 = pneg %p80
        $region76: #{binaural_loss.1} parent=73 // pred_check_branch
          %1212 = sbr.rel (%p1210) target = $region78
        $region77: #{binaural_loss.1} parent=73 // pred_region
          %p1213 = scmp.lt.s32.totalorder %s20, 1
          %s1214 = scalar_select %p1213, %s20, 1
          %p1215 = scmp.lt.s32.totalorder %s21, 2
          %s1216 = scalar_select %p1215, %s21, 2
          %s1217 = smul.addr %s1214, 3
          %s1218 = sadd.s32 %s1216, %s1217
          %s1219 = smul.addr %s1218, 8
          %s1220 = scalar_lea.vmem %s1, %s1219
        $region78: #{binaural_loss.1} parent=73 // pred_fallthru
          _
        // Predicated region
        $region79: #{binaural_loss.1} parent=73 // pred_check
          %p1221 = pneg %p108
        $region80: #{binaural_loss.1} parent=73 // pred_check_branch
          %1223 = sbr.rel (%p1221) target = $region82
        $region81: #{binaural_loss.1} parent=73 // pred_region
          %p1224 = scmp.lt.s32.totalorder %s20, 1
          %s1225 = scalar_select %p1224, %s20, 1
          %p1226 = scmp.lt.s32.totalorder %s21, 2
          %s1227 = scalar_select %p1226, %s21, 2
          %s1228 = smul.addr %s1225, 3
          %s1229 = sadd.s32 %s1227, %s1228
          %s1230 = smul.addr %s1229, 8
          %s1231 = scalar_lea.vmem %s2, %s1230
        $region82: #{binaural_loss.1} parent=73 // pred_fallthru
          _
      $region74: #{binaural_loss.1} parent=5 // pred_fallthru
        _
    $region6: #{binaural_loss.1} parent=1 // loop_footer
      %s13 = sadd.s32 1, %s9
    $region7: #{binaural_loss.1} parent=1 // loop_footer_branch
      %8 = sbr.rel target = $region3
    $region8: #{binaural_loss.1} parent=1 // loop_exit
      _

</llo_original>
